<compile_context>
chip_gen: v7x
topology: tpu7x:2x2x1
jax: 0.10.0
libtpu: 0.0.40
codegen_flags: <defaults>
</compile_context>

<pallas_src>
import functools

import jax
import jax.numpy as jnp
from jax.experimental import pallas as pl
from jax.experimental.pallas import tpu as pltpu


def _round_up(x, m):
    return pl.cdiv(x, m) * m


def _critic_kernel(use_tanh,
                   x_ref,
                   w0_ref, b0_ref,
                   w1_ref, b1_ref,
                   w12_ref, b12_ref,
                   w13_ref, b13_ref,
                   w2_ref, b2_ref,
                   w3_ref, b3_ref,
                   out_ref):
    act = jnp.tanh if use_tanh else (lambda t: jnp.maximum(t, 0.0))

    def dense(h_f32, w_ref, b_ref):
        # bf16 x bf16 on the MXU with f32 accumulation; bias add stays f32.
        return jnp.dot(h_f32.astype(jnp.bfloat16), w_ref[...],
                       preferred_element_type=jnp.float32) + b_ref[...]

    x = x_ref[...]                                   # [TB, state_dim] f32

    # fc0: FeatureExtractor(state_dim -> 512)  (modeled as Linear, see TODO)
    h = dense(x, w0_ref, b0_ref)                     # [TB, 512]
    # fc1: 512 -> 256
    h = act(dense(h, w1_ref, b1_ref))                # [TB, 256]
    # fc12: 256 -> 256
    h = act(dense(h, w12_ref, b12_ref))              # [TB, 256]
    # fc13: 256 -> 256
    h = act(dense(h, w13_ref, b13_ref))              # [TB, 256]
    # fc2: 256 -> 64
    h = act(dense(h, w2_ref, b2_ref))                # [TB, 64]

    # fc3: 64 -> 1 value head. N=1 output column would waste a full MXU pass,
    # so do it as a VPU broadcast-multiply + lane reduction (XLU), all in f32.
    v = jnp.sum(h * w3_ref[...], axis=-1, keepdims=True) + b3_ref[...]
    out_ref[...] = v.astype(out_ref.dtype)           # [TB, 1]


def critic_forward(s, params, *, use_tanh=True, max_tile=256):
    """s: [B, state_dim] float32. Returns v_s: [B, 1] float32."""
    B, state_dim = s.shape

    # Batch tile: at least the real batch rounded to 8 sublanes, capped so the
    # [TB, 512] f32 intermediate stays small (TB=256 -> ~0.5 MiB).
    TB = min(max_tile, _round_up(B, 8))
    B_pad = _round_up(B, TB)
    if B_pad != B:
        s = jnp.pad(s, ((0, B_pad - B), (0, 0)))
    grid = (B_pad // TB,)

    w0, b0 = params["fc0"]
    w1, b1 = params["fc1"]
    w12, b12 = params["fc12"]
    w13, b13 = params["fc13"]
    w2, b2 = params["fc2"]
    w3, b3 = params["fc3"]

    # bf16 weights for the MXU layers; fc3 row + all biases stay f32.
    flat = [w0.astype(jnp.bfloat16), b0,
            w1.astype(jnp.bfloat16), b1,
            w12.astype(jnp.bfloat16), b12,
            w13.astype(jnp.bfloat16), b13,
            w2.astype(jnp.bfloat16), b2,
            w3.reshape(1, -1).astype(jnp.float32),   # [1, 64] row
            b3.reshape(1, 1).astype(jnp.float32)]    # [1, 1]

    x_spec = pl.BlockSpec((TB, state_dim), lambda i: (i, 0))
    out_spec = pl.BlockSpec((TB, 1), lambda i: (i, 0))
    # Constant block index -> weights/biases are fetched once and stay resident
    # in VMEM across all grid steps.
    resident_specs = [pl.BlockSpec(a.shape, lambda i: (0, 0)) for a in flat]

    kernel = functools.partial(_critic_kernel, use_tanh)
    out = pl.pallas_call(
        kernel,
        out_shape=jax.ShapeDtypeStruct((B_pad, 1), jnp.float32),
        grid=grid,
        in_specs=[x_spec] + resident_specs,
        out_specs=out_spec,
        compiler_params=pltpu.CompilerParams(
            dimension_semantics=("parallel",),          # shard batch across TCs
            vmem_limit_bytes=64 * 1024 * 1024),         # headroom on v5e too
    )(s, *flat)
    return out[:B]


def _make_params(key, state_dim):
    """Deterministic parameter init mirroring the module's shapes.

    fc1/fc12/fc13/fc2/fc3 use orthogonal init (as in use_orthogonal_init),
    biases are zero. Weights are stored as [in, out].
    """
    ortho = jax.nn.initializers.orthogonal()
    sizes = {
        "fc0": (state_dim, 512),
        "fc1": (512, 256),
        "fc12": (256, 256),
        "fc13": (256, 256),
        "fc2": (256, 64),
        "fc3": (64, 1),
    }
    params = {}
    for name, (fin, fout) in sizes.items():
        key, kw = jax.random.split(key)
        if name == "fc0":
            # FeatureExtractor internals unknown: plain scaled-normal init.
            w = jax.random.normal(kw, (fin, fout), jnp.float32) / jnp.sqrt(fin)
        else:
            w = ortho(kw, (fin, fout), jnp.float32)
        b = jnp.zeros((1, fout), jnp.float32)
        params[name] = (w, b)
    return params


def _reference_forward(s, params, use_tanh=True):
    """Pure-JAX reference with the same mixed precision as the kernel."""
    act = jnp.tanh if use_tanh else (lambda t: jnp.maximum(t, 0.0))

    def dense(h, name):
        w, b = params[name]
        return jnp.dot(h.astype(jnp.bfloat16), w.astype(jnp.bfloat16),
                       preferred_element_type=jnp.float32) + b

    h = dense(s, "fc0")
    h = act(dense(h, "fc1"))
    h = act(dense(h, "fc12"))
    h = act(dense(h, "fc13"))
    h = act(dense(h, "fc2"))
    w3, b3 = params["fc3"]
    return h @ w3 + b3              # fc3 kept in f32, like the kernel


if __name__ == "__main__":
    key = jax.random.PRNGKey(0)
    state_dim = 32       # args.state_dim
    use_tanh = True      # args.use_tanh = 1 -> Tanh

    key, ks = jax.random.split(key)
    params = _make_params(key, state_dim)

    # Small batch (single grid step).
    s_small = jax.random.normal(ks, (8, state_dim), jnp.float32)
    v_small = jax.block_until_ready(
        critic_forward(s_small, params, use_tanh=use_tanh))
    v_small_ref = _reference_forward(s_small, params, use_tanh)
    assert v_small.shape == (8, 1)
    assert jnp.allclose(v_small, v_small_ref, atol=5e-3, rtol=5e-3)

    # Larger batch exercises the tiled grid (>1 step), padding, and the
    # "parallel" batch axis (megacore sharding on dual-TC chips).
    key, ks2 = jax.random.split(key)
    s_big = jax.random.normal(ks2, (300, state_dim), jnp.float32)
    v_big = jax.block_until_ready(
        critic_forward(s_big, params, use_tanh=use_tanh))
    v_big_ref = _reference_forward(s_big, params, use_tanh)
    assert v_big.shape == (300, 1)
    assert jnp.allclose(v_big, v_big_ref, atol=5e-3, rtol=5e-3)

    print("KERNEL_OK")
</pallas_src>

<mosaic_0001>
module attributes {stable_mosaic.version = 11 : i64} {
  func.func @_critic_kernel(%arg0: i32, %arg1: memref<8x32xf32, #tpu.memory_space<vmem>>, %arg2: memref<32x512xbf16, #tpu.memory_space<vmem>>, %arg3: memref<1x512xf32, #tpu.memory_space<vmem>>, %arg4: memref<512x256xbf16, #tpu.memory_space<vmem>>, %arg5: memref<1x256xf32, #tpu.memory_space<vmem>>, %arg6: memref<256x256xbf16, #tpu.memory_space<vmem>>, %arg7: memref<1x256xf32, #tpu.memory_space<vmem>>, %arg8: memref<256x256xbf16, #tpu.memory_space<vmem>>, %arg9: memref<1x256xf32, #tpu.memory_space<vmem>>, %arg10: memref<256x64xbf16, #tpu.memory_space<vmem>>, %arg11: memref<1x64xf32, #tpu.memory_space<vmem>>, %arg12: memref<1x64xf32, #tpu.memory_space<vmem>>, %arg13: memref<1x1xf32, #tpu.memory_space<vmem>>, %arg14: memref<8x1xf32, #tpu.memory_space<vmem>>) attributes {dimension_semantics = [#tpu.dimension_semantics<parallel>], iteration_bounds = array<i64: 1>, scalar_prefetch = 0 : i64, scratch_operands = 0 : i64, tpu.core_type = #tpu.core_type<tc>, window_params = [{transform_indices = @transform_0, window_bounds = array<i64: 8, 32>}, {pipeline_mode = #tpu.pipeline_mode<synchronous>, transform_indices = @transform_1, window_bounds = array<i64: 32, 512>}, {pipeline_mode = #tpu.pipeline_mode<synchronous>, transform_indices = @transform_2, window_bounds = array<i64: 1, 512>}, {pipeline_mode = #tpu.pipeline_mode<synchronous>, transform_indices = @transform_3, window_bounds = array<i64: 512, 256>}, {pipeline_mode = #tpu.pipeline_mode<synchronous>, transform_indices = @transform_4, window_bounds = array<i64: 1, 256>}, {pipeline_mode = #tpu.pipeline_mode<synchronous>, transform_indices = @transform_5, window_bounds = array<i64: 256, 256>}, {pipeline_mode = #tpu.pipeline_mode<synchronous>, transform_indices = @transform_6, window_bounds = array<i64: 1, 256>}, {pipeline_mode = #tpu.pipeline_mode<synchronous>, transform_indices = @transform_7, window_bounds = array<i64: 256, 256>}, {pipeline_mode = #tpu.pipeline_mode<synchronous>, transform_indices = @transform_8, window_bounds = array<i64: 1, 256>}, {pipeline_mode = #tpu.pipeline_mode<synchronous>, transform_indices = @transform_9, window_bounds = array<i64: 256, 64>}, {pipeline_mode = #tpu.pipeline_mode<synchronous>, transform_indices = @transform_10, window_bounds = array<i64: 1, 64>}, {pipeline_mode = #tpu.pipeline_mode<synchronous>, transform_indices = @transform_11, window_bounds = array<i64: 1, 64>}, {pipeline_mode = #tpu.pipeline_mode<synchronous>, transform_indices = @transform_12, window_bounds = array<i64: 1, 1>}, {transform_indices = @transform_13, window_bounds = array<i64: 8, 1>}]} {
    %c0 = arith.constant 0 : index
    %c0_0 = arith.constant 0 : index
    %0 = vector.load %arg1[%c0, %c0_0] : memref<8x32xf32, #tpu.memory_space<vmem>>, vector<8x32xf32>
    %1 = arith.truncf %0 : vector<8x32xf32> to vector<8x32xbf16>
    %c0_1 = arith.constant 0 : index
    %c0_2 = arith.constant 0 : index
    %2 = vector.load %arg2[%c0_1, %c0_2] : memref<32x512xbf16, #tpu.memory_space<vmem>>, vector<32x512xbf16>
    %cst = arith.constant dense<0.000000e+00> : vector<8x512xf32>
    %3 = tpu.matmul %1, %2, %cst {dimension_numbers = #tpu.dot_dimension_numbers<[1], [0], [0], [1], [0, 0, 1, 1], [], []>} : vector<8x32xbf16>, vector<32x512xbf16>, vector<8x512xf32> -> vector<8x512xf32>
    %c0_3 = arith.constant 0 : index
    %c0_4 = arith.constant 0 : index
    %4 = vector.load %arg3[%c0_3, %c0_4] : memref<1x512xf32, #tpu.memory_space<vmem>>, vector<1x512xf32>
    %5 = vector.broadcast %4 : vector<1x512xf32> to vector<8x512xf32>
    %6 = arith.addf %3, %5 : vector<8x512xf32>
    %7 = arith.truncf %6 : vector<8x512xf32> to vector<8x512xbf16>
    %c0_5 = arith.constant 0 : index
    %c0_6 = arith.constant 0 : index
    %8 = vector.load %arg4[%c0_5, %c0_6] : memref<512x256xbf16, #tpu.memory_space<vmem>>, vector<512x256xbf16>
    %cst_7 = arith.constant dense<0.000000e+00> : vector<8x256xf32>
    %9 = tpu.matmul %7, %8, %cst_7 {dimension_numbers = #tpu.dot_dimension_numbers<[1], [0], [0], [1], [0, 0, 1, 1], [], []>} : vector<8x512xbf16>, vector<512x256xbf16>, vector<8x256xf32> -> vector<8x256xf32>
    %c0_8 = arith.constant 0 : index
    %c0_9 = arith.constant 0 : index
    %10 = vector.load %arg5[%c0_8, %c0_9] : memref<1x256xf32, #tpu.memory_space<vmem>>, vector<1x256xf32>
    %11 = vector.broadcast %10 : vector<1x256xf32> to vector<8x256xf32>
    %12 = arith.addf %9, %11 : vector<8x256xf32>
    %13 = math.tanh %12 : vector<8x256xf32>
    %14 = arith.truncf %13 : vector<8x256xf32> to vector<8x256xbf16>
    %c0_10 = arith.constant 0 : index
    %c0_11 = arith.constant 0 : index
    %15 = vector.load %arg6[%c0_10, %c0_11] : memref<256x256xbf16, #tpu.memory_space<vmem>>, vector<256x256xbf16>
    %cst_12 = arith.constant dense<0.000000e+00> : vector<8x256xf32>
    %16 = tpu.matmul %14, %15, %cst_12 {dimension_numbers = #tpu.dot_dimension_numbers<[1], [0], [0], [1], [0, 0, 1, 1], [], []>} : vector<8x256xbf16>, vector<256x256xbf16>, vector<8x256xf32> -> vector<8x256xf32>
    %c0_13 = arith.constant 0 : index
    %c0_14 = arith.constant 0 : index
    %17 = vector.load %arg7[%c0_13, %c0_14] : memref<1x256xf32, #tpu.memory_space<vmem>>, vector<1x256xf32>
    %18 = vector.broadcast %17 : vector<1x256xf32> to vector<8x256xf32>
    %19 = arith.addf %16, %18 : vector<8x256xf32>
    %20 = math.tanh %19 : vector<8x256xf32>
    %21 = arith.truncf %20 : vector<8x256xf32> to vector<8x256xbf16>
    %c0_15 = arith.constant 0 : index
    %c0_16 = arith.constant 0 : index
    %22 = vector.load %arg8[%c0_15, %c0_16] : memref<256x256xbf16, #tpu.memory_space<vmem>>, vector<256x256xbf16>
    %cst_17 = arith.constant dense<0.000000e+00> : vector<8x256xf32>
    %23 = tpu.matmul %21, %22, %cst_17 {dimension_numbers = #tpu.dot_dimension_numbers<[1], [0], [0], [1], [0, 0, 1, 1], [], []>} : vector<8x256xbf16>, vector<256x256xbf16>, vector<8x256xf32> -> vector<8x256xf32>
    %c0_18 = arith.constant 0 : index
    %c0_19 = arith.constant 0 : index
    %24 = vector.load %arg9[%c0_18, %c0_19] : memref<1x256xf32, #tpu.memory_space<vmem>>, vector<1x256xf32>
    %25 = vector.broadcast %24 : vector<1x256xf32> to vector<8x256xf32>
    %26 = arith.addf %23, %25 : vector<8x256xf32>
    %27 = math.tanh %26 : vector<8x256xf32>
    %28 = arith.truncf %27 : vector<8x256xf32> to vector<8x256xbf16>
    %c0_20 = arith.constant 0 : index
    %c0_21 = arith.constant 0 : index
    %29 = vector.load %arg10[%c0_20, %c0_21] : memref<256x64xbf16, #tpu.memory_space<vmem>>, vector<256x64xbf16>
    %cst_22 = arith.constant dense<0.000000e+00> : vector<8x64xf32>
    %30 = tpu.matmul %28, %29, %cst_22 {dimension_numbers = #tpu.dot_dimension_numbers<[1], [0], [0], [1], [0, 0, 1, 1], [], []>} : vector<8x256xbf16>, vector<256x64xbf16>, vector<8x64xf32> -> vector<8x64xf32>
    %c0_23 = arith.constant 0 : index
    %c0_24 = arith.constant 0 : index
    %31 = vector.load %arg11[%c0_23, %c0_24] : memref<1x64xf32, #tpu.memory_space<vmem>>, vector<1x64xf32>
    %32 = vector.broadcast %31 : vector<1x64xf32> to vector<8x64xf32>
    %33 = arith.addf %30, %32 : vector<8x64xf32>
    %34 = math.tanh %33 : vector<8x64xf32>
    %c0_25 = arith.constant 0 : index
    %c0_26 = arith.constant 0 : index
    %35 = vector.load %arg12[%c0_25, %c0_26] : memref<1x64xf32, #tpu.memory_space<vmem>>, vector<1x64xf32>
    %36 = vector.broadcast %35 : vector<1x64xf32> to vector<8x64xf32>
    %37 = arith.mulf %34, %36 : vector<8x64xf32>
    %cst_27 = arith.constant dense<0.000000e+00> : vector<8xf32>
    %38 = vector.multi_reduction <add>, %37, %cst_27 [1] : vector<8x64xf32> to vector<8xf32>
    %39 = vector.shape_cast %38 : vector<8xf32> to vector<8x1xf32>
    %c0_28 = arith.constant 0 : index
    %c0_29 = arith.constant 0 : index
    %40 = vector.load %arg13[%c0_28, %c0_29] : memref<1x1xf32, #tpu.memory_space<vmem>>, vector<1x1xf32>
    %41 = vector.broadcast %40 : vector<1x1xf32> to vector<8x1xf32>
    %42 = arith.addf %39, %41 : vector<8x1xf32>
    %c0_30 = arith.constant 0 : index
    %c0_31 = arith.constant 0 : index
    %43 = vector.load %arg14[%c0_30, %c0_31] : memref<8x1xf32, #tpu.memory_space<vmem>>, vector<8x1xf32>
    tpu.vector_store %arg14[%c0_30, %c0_31], %42 {strides = array<i32>} : memref<8x1xf32, #tpu.memory_space<vmem>>, vector<8x1xf32>,
    return
  }
  func.func @transform_0(%arg0: i32) -> (i32, i32) {
    %c0_i32 = arith.constant 0 : i32
    %c0_i32_0 = arith.constant 0 : i32
    return %arg0, %c0_i32 : i32, i32
  }
  func.func @transform_1(%arg0: i32) -> (i32, i32) {
    %c0_i32 = arith.constant 0 : i32
    %c0_i32_0 = arith.constant 0 : i32
    %c0_i32_1 = arith.constant 0 : i32
    return %c0_i32, %c0_i32_0 : i32, i32
  }
  func.func @transform_2(%arg0: i32) -> (i32, i32) {
    %c0_i32 = arith.constant 0 : i32
    %c0_i32_0 = arith.constant 0 : i32
    %c0_i32_1 = arith.constant 0 : i32
    return %c0_i32, %c0_i32_0 : i32, i32
  }
  func.func @transform_3(%arg0: i32) -> (i32, i32) {
    %c0_i32 = arith.constant 0 : i32
    %c0_i32_0 = arith.constant 0 : i32
    %c0_i32_1 = arith.constant 0 : i32
    return %c0_i32, %c0_i32_0 : i32, i32
  }
  func.func @transform_4(%arg0: i32) -> (i32, i32) {
    %c0_i32 = arith.constant 0 : i32
    %c0_i32_0 = arith.constant 0 : i32
    %c0_i32_1 = arith.constant 0 : i32
    return %c0_i32, %c0_i32_0 : i32, i32
  }
  func.func @transform_5(%arg0: i32) -> (i32, i32) {
    %c0_i32 = arith.constant 0 : i32
    %c0_i32_0 = arith.constant 0 : i32
    %c0_i32_1 = arith.constant 0 : i32
    return %c0_i32, %c0_i32_0 : i32, i32
  }
  func.func @transform_6(%arg0: i32) -> (i32, i32) {
    %c0_i32 = arith.constant 0 : i32
    %c0_i32_0 = arith.constant 0 : i32
    %c0_i32_1 = arith.constant 0 : i32
    return %c0_i32, %c0_i32_0 : i32, i32
  }
  func.func @transform_7(%arg0: i32) -> (i32, i32) {
    %c0_i32 = arith.constant 0 : i32
    %c0_i32_0 = arith.constant 0 : i32
    %c0_i32_1 = arith.constant 0 : i32
    return %c0_i32, %c0_i32_0 : i32, i32
  }
  func.func @transform_8(%arg0: i32) -> (i32, i32) {
    %c0_i32 = arith.constant 0 : i32
    %c0_i32_0 = arith.constant 0 : i32
    %c0_i32_1 = arith.constant 0 : i32
    return %c0_i32, %c0_i32_0 : i32, i32
  }
  func.func @transform_9(%arg0: i32) -> (i32, i32) {
    %c0_i32 = arith.constant 0 : i32
    %c0_i32_0 = arith.constant 0 : i32
    %c0_i32_1 = arith.constant 0 : i32
    return %c0_i32, %c0_i32_0 : i32, i32
  }
  func.func @transform_10(%arg0: i32) -> (i32, i32) {
    %c0_i32 = arith.constant 0 : i32
    %c0_i32_0 = arith.constant 0 : i32
    %c0_i32_1 = arith.constant 0 : i32
    return %c0_i32, %c0_i32_0 : i32, i32
  }
  func.func @transform_11(%arg0: i32) -> (i32, i32) {
    %c0_i32 = arith.constant 0 : i32
    %c0_i32_0 = arith.constant 0 : i32
    %c0_i32_1 = arith.constant 0 : i32
    return %c0_i32, %c0_i32_0 : i32, i32
  }
  func.func @transform_12(%arg0: i32) -> (i32, i32) {
    %c0_i32 = arith.constant 0 : i32
    %c0_i32_0 = arith.constant 0 : i32
    %c0_i32_1 = arith.constant 0 : i32
    return %c0_i32, %c0_i32_0 : i32, i32
  }
  func.func @transform_13(%arg0: i32) -> (i32, i32) {
    %c0_i32 = arith.constant 0 : i32
    %c0_i32_0 = arith.constant 0 : i32
    return %arg0, %c0_i32 : i32, i32
  }
}

</mosaic_0001>

<llo_original>
// kernel: tpu_custom_call.1
$region0: #{tpu_custom_call.1}
  #allocation0 [shape = 'u32[]', space=smem, size = 0x4, offset = 0x4, fixed_abs, tag = 'smem constant byte address 0x4 - core index']
  #allocation1 [shape = 'u32[144,128]{1,0:T(1,128)}', space=vmem, size = 0x12000, scoped, tag = 'internal scratch']
  #allocation2 [shape = 'f32[1,1]{1,0:T(1,128)S(1)}', space=vmem, size = 0x200, scoped, tag = 'scoped memory for tpu_custom_call.1']
  %s0 = inlined_call_operand.hbm [shape: f32[8,32], index: 0, kind: input, shape index: {}]
  %s1 = inlined_call_operand.hbm [shape: bf16[32,512], index: 1, kind: input, shape index: {}]
  %s2 = inlined_call_operand.hbm [shape: f32[1,512], index: 2, kind: input, shape index: {}]
  %s3 = inlined_call_operand.hbm [shape: bf16[512,256], index: 3, kind: input, shape index: {}]
  %s4 = inlined_call_operand.hbm [shape: f32[1,256], index: 4, kind: input, shape index: {}]
  %s5 = inlined_call_operand.hbm [shape: bf16[256,256], index: 5, kind: input, shape index: {}]
  %s6 = inlined_call_operand.hbm [shape: f32[1,256], index: 6, kind: input, shape index: {}]
  %s7 = inlined_call_operand.hbm [shape: bf16[256,256], index: 7, kind: input, shape index: {}]
  %s8 = inlined_call_operand.hbm [shape: f32[1,256], index: 8, kind: input, shape index: {}]
  %s9 = inlined_call_operand.hbm [shape: bf16[256,64], index: 9, kind: input, shape index: {}]
  %s10 = inlined_call_operand.hbm [shape: f32[1,64], index: 10, kind: input, shape index: {}]
  %s11 = inlined_call_operand.hbm [shape: f32[1,64], index: 11, kind: input, shape index: {}]
  %s12 = inlined_call_operand.<no memory space> [shape: f32[1,1], index: 12, kind: input, shape index: {}]
  %s13 = inlined_call_operand.hbm [shape: f32[8,1], index: 13, kind: output, shape index: {}]
  %s14 = sld [smem:[#allocation0]]
  $region110: #{tpu_custom_call.1} parent=0
    _
  %s16 = ssub.s32 1, %s14
  %s17 = scalar_select 0, %s16, %s14
  %v18 = vstv %s12
  %19 = vst [vmem:[#allocation2] sm:$0x1] %v18
  $region1: #{tpu_custom_call.1} parent=0
    #allocation3 [shape = 'u8[4096]{0}', space=vmem, size = 0x1000, scoped, tag = 'input window, operand 0, single buffered']
    #allocation4 [shape = 's32[1]{0}', space=sflag, size = 0x4, scoped, tag = 'scoped memory for tpu_custom_call.1']
    #allocation5 [shape = 's32[1]{0}', space=sflag, size = 0x4, scoped, tag = 'scoped memory for tpu_custom_call.1']
    #allocation6 [shape = 'u8[32768]{0}', space=vmem, size = 0x8000, scoped, tag = 'input window, operand 1, single buffered']
    #allocation7 [shape = 's32[1]{0}', space=sflag, size = 0x4, scoped, tag = 'scoped memory for tpu_custom_call.1']
    #allocation8 [shape = 'u8[2048]{0}', space=vmem, size = 0x800, scoped, tag = 'input window, operand 2, single buffered']
    #allocation9 [shape = 'u8[262144]{0}', space=vmem, size = 0x40000, scoped, tag = 'input window, operand 3, single buffered']
    #allocation10 [shape = 's32[1]{0}', space=sflag, size = 0x4, scoped, tag = 'scoped memory for tpu_custom_call.1']
    #allocation11 [shape = 'u8[1024]{0}', space=vmem, size = 0x400, scoped, tag = 'input window, operand 4, single buffered']
    #allocation12 [shape = 'u8[131072]{0}', space=vmem, size = 0x20000, scoped, tag = 'input window, operand 5, single buffered']
    #allocation13 [shape = 's32[1]{0}', space=sflag, size = 0x4, scoped, tag = 'scoped memory for tpu_custom_call.1']
    #allocation14 [shape = 'u8[1024]{0}', space=vmem, size = 0x400, scoped, tag = 'input window, operand 6, single buffered']
    #allocation15 [shape = 'u8[131072]{0}', space=vmem, size = 0x20000, scoped, tag = 'input window, operand 7, single buffered']
    #allocation16 [shape = 's32[1]{0}', space=sflag, size = 0x4, scoped, tag = 'scoped memory for tpu_custom_call.1']
    #allocation17 [shape = 'u8[1024]{0}', space=vmem, size = 0x400, scoped, tag = 'input window, operand 8, single buffered']
    #allocation18 [shape = 'u8[65536]{0}', space=vmem, size = 0x10000, scoped, tag = 'input window, operand 9, single buffered']
    #allocation19 [shape = 's32[1]{0}', space=sflag, size = 0x4, scoped, tag = 'scoped memory for tpu_custom_call.1']
    #allocation20 [shape = 'u8[512]{0}', space=vmem, size = 0x400, scoped, tag = 'input window, operand 10, single buffered']
    #allocation21 [shape = 'u8[512]{0}', space=vmem, size = 0x400, scoped, tag = 'input window, operand 11, single buffered']
    #allocation22 [shape = 's32[1]{0}', space=sflag, size = 0x4, scoped, tag = 'scoped memory for tpu_custom_call.1']
    #allocation23 [shape = 'u8[4096]{0}', space=vmem, size = 0x1000, scoped, tag = 'output window, operand 0, single buffered']
    %20 = vsyncpa [#allocation4], 0
    %21 = vsyncpa [#allocation7], 0
    %22 = vsyncpa [#allocation10], 0
    %23 = vsyncpa [#allocation13], 0
    %24 = vsyncpa [#allocation16], 0
    %25 = vsyncpa [#allocation19], 0
    %26 = vsyncpa [#allocation22], 0
    %27 = vsyncpa [#allocation5], 0
    // Predicated region
    $region2: #{tpu_custom_call.1} parent=1 // pred_check
      _
    $region3: #{tpu_custom_call.1} parent=1 // pred_check_branch
      %29 = sbr.rel (0) target = $region5
    $region4: #{tpu_custom_call.1} parent=1 // pred_region
      %s31 = ssub.s32 128, 128
      %32 = vsyncadd [#allocation4], %s31
      %s34 = sshll.u32 [#allocation3], 4
      %s35 = int_to_ptr.vmem [resolvable:$true] %s34
      %37 = dma.hbm_to_vmem [thread:$0]  %s0, 128, %s35, [#allocation4]
    $region5: #{tpu_custom_call.1} parent=1 // pred_fallthru
      _
    // Predicated region
    $region6: #{tpu_custom_call.1} parent=1 // pred_check
      _
    $region7: #{tpu_custom_call.1} parent=1 // pred_check_branch
      %39 = sbr.rel (0) target = $region9
    $region8: #{tpu_custom_call.1} parent=1 // pred_region
      %s41 = ssub.s32 1024, 1024
      %42 = vsyncadd [#allocation7], %s41
      %s43 = sshll.u32 [#allocation6], 4
      %s44 = int_to_ptr.vmem [resolvable:$true] %s43
      %49 = dma.hbm_to_vmem [thread:$0]  %s1, 1024, %s44, [#allocation7], 256, 256, 16
    $region9: #{tpu_custom_call.1} parent=1 // pred_fallthru
      _
    // Predicated region
    $region10: #{tpu_custom_call.1} parent=1 // pred_check
      _
    $region11: #{tpu_custom_call.1} parent=1 // pred_check_branch
      %51 = sbr.rel (0) target = $region13
    $region12: #{tpu_custom_call.1} parent=1 // pred_region
      %s53 = ssub.s32 64, 64
      %54 = vsyncadd [#allocation7], %s53
      %s56 = sshll.u32 [#allocation8], 4
      %s57 = int_to_ptr.vmem [resolvable:$true] %s56
      %59 = dma.hbm_to_vmem [thread:$0]  %s2, 64, %s57, [#allocation7]
    $region13: #{tpu_custom_call.1} parent=1 // pred_fallthru
      _
    // Predicated region
    $region14: #{tpu_custom_call.1} parent=1 // pred_check
      _
    $region15: #{tpu_custom_call.1} parent=1 // pred_check_branch
      %61 = sbr.rel (0) target = $region17
    $region16: #{tpu_custom_call.1} parent=1 // pred_region
      %s63 = ssub.s32 8192, 8192
      %64 = vsyncadd [#allocation10], %s63
      %s65 = sshll.u32 [#allocation9], 4
      %s66 = int_to_ptr.vmem [resolvable:$true] %s65
      %71 = dma.hbm_to_vmem [thread:$0]  %s3, 8192, %s66, [#allocation10], 128, 128, 8
    $region17: #{tpu_custom_call.1} parent=1 // pred_fallthru
      _
    // Predicated region
    $region18: #{tpu_custom_call.1} parent=1 // pred_check
      _
    $region19: #{tpu_custom_call.1} parent=1 // pred_check_branch
      %73 = sbr.rel (0) target = $region21
    $region20: #{tpu_custom_call.1} parent=1 // pred_region
      %s75 = ssub.s32 32, 32
      %76 = vsyncadd [#allocation10], %s75
      %s78 = sshll.u32 [#allocation11], 4
      %s79 = int_to_ptr.vmem [resolvable:$true] %s78
      %81 = dma.hbm_to_vmem [thread:$0]  %s4, 32, %s79, [#allocation10]
    $region21: #{tpu_custom_call.1} parent=1 // pred_fallthru
      _
    // Predicated region
    $region22: #{tpu_custom_call.1} parent=1 // pred_check
      _
    $region23: #{tpu_custom_call.1} parent=1 // pred_check_branch
      %83 = sbr.rel (0) target = $region25
    $region24: #{tpu_custom_call.1} parent=1 // pred_region
      %s85 = ssub.s32 4096, 4096
      %86 = vsyncadd [#allocation13], %s85
      %s87 = sshll.u32 [#allocation12], 4
      %s88 = int_to_ptr.vmem [resolvable:$true] %s87
      %93 = dma.hbm_to_vmem [thread:$0]  %s5, 4096, %s88, [#allocation13], 128, 128, 8
    $region25: #{tpu_custom_call.1} parent=1 // pred_fallthru
      _
    // Predicated region
    $region26: #{tpu_custom_call.1} parent=1 // pred_check
      _
    $region27: #{tpu_custom_call.1} parent=1 // pred_check_branch
      %95 = sbr.rel (0) target = $region29
    $region28: #{tpu_custom_call.1} parent=1 // pred_region
      %s97 = ssub.s32 32, 32
      %98 = vsyncadd [#allocation13], %s97
      %s100 = sshll.u32 [#allocation14], 4
      %s101 = int_to_ptr.vmem [resolvable:$true] %s100
      %103 = dma.hbm_to_vmem [thread:$0]  %s6, 32, %s101, [#allocation13]
    $region29: #{tpu_custom_call.1} parent=1 // pred_fallthru
      _
    // Predicated region
    $region30: #{tpu_custom_call.1} parent=1 // pred_check
      _
    $region31: #{tpu_custom_call.1} parent=1 // pred_check_branch
      %105 = sbr.rel (0) target = $region33
    $region32: #{tpu_custom_call.1} parent=1 // pred_region
      %s107 = ssub.s32 4096, 4096
      %108 = vsyncadd [#allocation16], %s107
      %s109 = sshll.u32 [#allocation15], 4
      %s110 = int_to_ptr.vmem [resolvable:$true] %s109
      %115 = dma.hbm_to_vmem [thread:$0]  %s7, 4096, %s110, [#allocation16], 128, 128, 8
    $region33: #{tpu_custom_call.1} parent=1 // pred_fallthru
      _
    // Predicated region
    $region34: #{tpu_custom_call.1} parent=1 // pred_check
      _
    $region35: #{tpu_custom_call.1} parent=1 // pred_check_branch
      %117 = sbr.rel (0) target = $region37
    $region36: #{tpu_custom_call.1} parent=1 // pred_region
      %s119 = ssub.s32 32, 32
      %120 = vsyncadd [#allocation16], %s119
      %s122 = sshll.u32 [#allocation17], 4
      %s123 = int_to_ptr.vmem [resolvable:$true] %s122
      %125 = dma.hbm_to_vmem [thread:$0]  %s8, 32, %s123, [#allocation16]
    $region37: #{tpu_custom_call.1} parent=1 // pred_fallthru
      _
    // Predicated region
    $region38: #{tpu_custom_call.1} parent=1 // pred_check
      _
    $region39: #{tpu_custom_call.1} parent=1 // pred_check_branch
      %127 = sbr.rel (0) target = $region41
    $region40: #{tpu_custom_call.1} parent=1 // pred_region
      %s129 = ssub.s32 2048, 2048
      %130 = vsyncadd [#allocation19], %s129
      %s131 = sshll.u32 [#allocation18], 4
      %s132 = int_to_ptr.vmem [resolvable:$true] %s131
      %137 = dma.hbm_to_vmem [thread:$0]  %s9, 2048, %s132, [#allocation19], 64, 64, 4
    $region41: #{tpu_custom_call.1} parent=1 // pred_fallthru
      _
    // Predicated region
    $region42: #{tpu_custom_call.1} parent=1 // pred_check
      _
    $region43: #{tpu_custom_call.1} parent=1 // pred_check_branch
      %139 = sbr.rel (0) target = $region45
    $region44: #{tpu_custom_call.1} parent=1 // pred_region
      %s141 = ssub.s32 16, 16
      %142 = vsyncadd [#allocation19], %s141
      %s144 = sshll.u32 [#allocation20], 4
      %s145 = int_to_ptr.vmem [resolvable:$true] %s144
      %147 = dma.hbm_to_vmem [thread:$0]  %s10, 16, %s145, [#allocation19]
    $region45: #{tpu_custom_call.1} parent=1 // pred_fallthru
      _
    // Predicated region
    $region46: #{tpu_custom_call.1} parent=1 // pred_check
      _
    $region47: #{tpu_custom_call.1} parent=1 // pred_check_branch
      %149 = sbr.rel (0) target = $region49
    $region48: #{tpu_custom_call.1} parent=1 // pred_region
      %s151 = ssub.s32 16, 16
      %152 = vsyncadd [#allocation22], %s151
      %s154 = sshll.u32 [#allocation21], 4
      %s155 = int_to_ptr.vmem [resolvable:$true] %s154
      %157 = dma.hbm_to_vmem [thread:$0]  %s11, 16, %s155, [#allocation22]
    $region49: #{tpu_custom_call.1} parent=1 // pred_fallthru
      _
    // Predicated region
    $region50: #{tpu_custom_call.1} parent=1 // pred_check
      _
    $region51: #{tpu_custom_call.1} parent=1 // pred_check_branch
      %159 = sbr.rel (0) target = $region53
    $region52: #{tpu_custom_call.1} parent=1 // pred_region
      _
    $region53: #{tpu_custom_call.1} parent=1 // pred_fallthru
      _
    // Predicated region
    $region54: #{tpu_custom_call.1} parent=1 // pred_check
      _
    $region55: #{tpu_custom_call.1} parent=1 // pred_check_branch
      %161 = sbr.rel (0) target = $region57
    $region56: #{tpu_custom_call.1} parent=1 // pred_region
      %162 = dma.done [#allocation4], 128
    $region57: #{tpu_custom_call.1} parent=1 // pred_fallthru
      _
    // Predicated region
    $region58: #{tpu_custom_call.1} parent=1 // pred_check
      _
    $region59: #{tpu_custom_call.1} parent=1 // pred_check_branch
      %164 = sbr.rel (0) target = $region61
    $region60: #{tpu_custom_call.1} parent=1 // pred_region
      %165 = dma.done [#allocation7], 1024
    $region61: #{tpu_custom_call.1} parent=1 // pred_fallthru
      _
    // Predicated region
    $region62: #{tpu_custom_call.1} parent=1 // pred_check
      _
    $region63: #{tpu_custom_call.1} parent=1 // pred_check_branch
      %167 = sbr.rel (0) target = $region65
    $region64: #{tpu_custom_call.1} parent=1 // pred_region
      %168 = dma.done [#allocation7], 64
    $region65: #{tpu_custom_call.1} parent=1 // pred_fallthru
      _
    // Predicated region
    $region66: #{tpu_custom_call.1} parent=1 // pred_check
      _
    $region67: #{tpu_custom_call.1} parent=1 // pred_check_branch
      %170 = sbr.rel (0) target = $region69
    $region68: #{tpu_custom_call.1} parent=1 // pred_region
      %171 = dma.done [#allocation10], 8192
    $region69: #{tpu_custom_call.1} parent=1 // pred_fallthru
      _
    // Predicated region
    $region70: #{tpu_custom_call.1} parent=1 // pred_check
      _
    $region71: #{tpu_custom_call.1} parent=1 // pred_check_branch
      %173 = sbr.rel (0) target = $region73
    $region72: #{tpu_custom_call.1} parent=1 // pred_region
      %174 = dma.done [#allocation10], 32
    $region73: #{tpu_custom_call.1} parent=1 // pred_fallthru
      _
    // Predicated region
    $region74: #{tpu_custom_call.1} parent=1 // pred_check
      _
    $region75: #{tpu_custom_call.1} parent=1 // pred_check_branch
      %176 = sbr.rel (0) target = $region77
    $region76: #{tpu_custom_call.1} parent=1 // pred_region
      %177 = dma.done [#allocation13], 4096
    $region77: #{tpu_custom_call.1} parent=1 // pred_fallthru
      _
    // Predicated region
    $region78: #{tpu_custom_call.1} parent=1 // pred_check
      _
    $region79: #{tpu_custom_call.1} parent=1 // pred_check_branch
      %179 = sbr.rel (0) target = $region81
    $region80: #{tpu_custom_call.1} parent=1 // pred_region
      %180 = dma.done [#allocation13], 32
    $region81: #{tpu_custom_call.1} parent=1 // pred_fallthru
      _
    // Predicated region
    $region82: #{tpu_custom_call.1} parent=1 // pred_check
      _
    $region83: #{tpu_custom_call.1} parent=1 // pred_check_branch
      %182 = sbr.rel (0) target = $region85
    $region84: #{tpu_custom_call.1} parent=1 // pred_region
      %183 = dma.done [#allocation16], 4096
    $region85: #{tpu_custom_call.1} parent=1 // pred_fallthru
      _
    // Predicated region
    $region86: #{tpu_custom_call.1} parent=1 // pred_check
      _
    $region87: #{tpu_custom_call.1} parent=1 // pred_check_branch
      %185 = sbr.rel (0) target = $region89
    $region88: #{tpu_custom_call.1} parent=1 // pred_region
      %186 = dma.done [#allocation16], 32
    $region89: #{tpu_custom_call.1} parent=1 // pred_fallthru
      _
    // Predicated region
    $region90: #{tpu_custom_call.1} parent=1 // pred_check
      _
    $region91: #{tpu_custom_call.1} parent=1 // pred_check_branch
      %188 = sbr.rel (0) target = $region93
    $region92: #{tpu_custom_call.1} parent=1 // pred_region
      %189 = dma.done [#allocation19], 2048
    $region93: #{tpu_custom_call.1} parent=1 // pred_fallthru
      _
    // Predicated region
    $region94: #{tpu_custom_call.1} parent=1 // pred_check
      _
    $region95: #{tpu_custom_call.1} parent=1 // pred_check_branch
      %191 = sbr.rel (0) target = $region97
    $region96: #{tpu_custom_call.1} parent=1 // pred_region
      %192 = dma.done [#allocation19], 16
    $region97: #{tpu_custom_call.1} parent=1 // pred_fallthru
      _
    // Predicated region
    $region98: #{tpu_custom_call.1} parent=1 // pred_check
      _
    $region99: #{tpu_custom_call.1} parent=1 // pred_check_branch
      %194 = sbr.rel (0) target = $region101
    $region100: #{tpu_custom_call.1} parent=1 // pred_region
      %195 = dma.done [#allocation22], 16
    $region101: #{tpu_custom_call.1} parent=1 // pred_fallthru
      _
    %v197 = vld [vmem:[#allocation3] sm:$0xff]
    %v198 = vpack.c.bf16 %v197, %v197
    %v199 = vld [vmem:[#allocation6] sm:$0xff]
    %v200 = vld [vmem:[#allocation6 + $0x8] sm:$0xff]
    %v201 = vld [vmem:[#allocation6 + $0x10] sm:$0xff]
    %v202 = vld [vmem:[#allocation6 + $0x18] sm:$0xff]
    %v203 = vld [vmem:[#allocation6 + $0x20] sm:$0xff]
    %v204 = vld [vmem:[#allocation6 + $0x28] sm:$0xff]
    %v205 = vld [vmem:[#allocation6 + $0x30] sm:$0xff]
    %v206 = vld [vmem:[#allocation6 + $0x38] sm:$0xff]
    %v207 = vld [vmem:[#allocation8] sm:$0xf]
    %v209 = vlaneseq
    %v210 = vshrl.u32 %v209, 7
    %v211 = vsub.s32 0, %v210
    %v212 = vrot.slane %v207, %v211
    %v213 = vlaneseq
    %v214 = vshrl.u32 %v213, 7
    %v215 = vsub.s32 1, %v214
    %v216 = vrot.slane %v207, %v215
    %v217 = vlaneseq
    %v218 = vshrl.u32 %v217, 7
    %v219 = vsub.s32 2, %v218
    %v220 = vrot.slane %v207, %v219
    %v221 = vlaneseq
    %v222 = vshrl.u32 %v221, 7
    %v223 = vsub.s32 3, %v222
    %v224 = vrot.slane %v207, %v223
    %v237 = vunpack.c.l.b16 %v199
    %v238 = vunpack.c.h.b16 %v199
    %v239 = vunpack.c.l.b16 %v200
    %v240 = vunpack.c.h.b16 %v200
    %v241 = vunpack.c.l.b16 %v201
    %v242 = vunpack.c.h.b16 %v201
    %v243 = vunpack.c.l.b16 %v202
    %v244 = vunpack.c.h.b16 %v202
    %v245 = vunpack.c.l.b16 %v203
    %v246 = vunpack.c.h.b16 %v203
    %v247 = vunpack.c.l.b16 %v204
    %v248 = vunpack.c.h.b16 %v204
    %v249 = vunpack.c.l.b16 %v205
    %v250 = vunpack.c.h.b16 %v205
    %v251 = vunpack.c.l.b16 %v206
    %v252 = vunpack.c.h.b16 %v206
    %v253 = vpack.c.b16 %v241, %v237
    %v254 = vpack.c.b16 %v242, %v238
    %v255 = vpack.c.b16 %v243, %v239
    %v256 = vpack.c.b16 %v244, %v240
    %v257 = vpack.c.b16 %v249, %v245
    %v258 = vpack.c.b16 %v250, %v246
    %v259 = vpack.c.b16 %v251, %v247
    %v260 = vpack.c.b16 %v252, %v248
    %vm269 = vcmask 261120
    %v271 = vsel %vm269, %v198, 0
    %273 = vmatprep.subr.bf16.mxu0 %v254
    %274 = vmatpush1.bf16.msra.mxu0 %v253
    %275 = vmatprep.subr.bf16.mxu0 %v258
    %276 = vmatpush1.bf16.msra.mxu0 %v257
    %277 = vmatprep.subr.bf16.mxu0 0
    %278 = vmatpush1.bf16.msra.mxu0 0
    %279 = vmatprep.subr.bf16.mxu0 0
    %280 = vmatpush1.bf16.msra.mxu0 0
    %281 = vmatprep.subr.bf16.mxu0 0
    %282 = vmatpush1.bf16.msra.mxu0 0
    %283 = vmatprep.subr.bf16.mxu0 0
    %284 = vmatpush1.bf16.msra.mxu0 0
    %285 = vmatprep.subr.bf16.mxu0 0
    %286 = vmatpush1.bf16.msra.mxu0 0
    %287 = vmatprep.subr.bf16.mxu0 0
    %288 = vmatpush1.bf16.msra.mxu0 0
    %289 = vmatprep.subr.bf16.mxu0 0
    %290 = vmatpush1.bf16.msra.mxu0 0
    %291 = vmatprep.subr.bf16.mxu0 0
    %292 = vmatpush1.bf16.msra.mxu0 0
    %293 = vmatprep.subr.bf16.mxu0 0
    %294 = vmatpush1.bf16.msra.mxu0 0
    %295 = vmatprep.subr.bf16.mxu0 0
    %296 = vmatpush1.bf16.msra.mxu0 0
    %297 = vmatprep.subr.bf16.mxu0 0
    %298 = vmatpush1.bf16.msra.mxu0 0
    %299 = vmatprep.subr.bf16.mxu0 0
    %300 = vmatpush1.bf16.msra.mxu0 0
    %301 = vmatprep.subr.bf16.mxu0 0
    %302 = vmatpush1.bf16.msra.mxu0 0
    %303 = vmatprep.subr.bf16.mxu0 0
    %304 = vmatpush1.bf16.msra.mxu0 0
    %305 = vmatprep.mubr.bf16.mxu0 0
    %306 = vmatmul.mubr.bf16.gmra.mrb[0].mxu0 %v271
    %v307 = vpop.f32.mrb[0].mxu0
    %v308 = vadd.f32 %v212, %v307
    %v309 = vpop.f32.mrb[0].mxu0
    %v310 = vadd.f32 %v216, %v309
    %v311 = vpop.f32.mrb[0].mxu0
    %v312 = vpop.f32.mrb[0].mxu0
    %313 = vdwg.mxu0
    %314 = vmatprep.subr.bf16.mxu0 %v256
    %315 = vmatpush1.bf16.msra.mxu0 %v255
    %316 = vmatprep.subr.bf16.mxu0 %v260
    %317 = vmatpush1.bf16.msra.mxu0 %v259
    %318 = vmatprep.subr.bf16.mxu0 0
    %319 = vmatpush1.bf16.msra.mxu0 0
    %320 = vmatprep.subr.bf16.mxu0 0
    %321 = vmatpush1.bf16.msra.mxu0 0
    %322 = vmatprep.subr.bf16.mxu0 0
    %323 = vmatpush1.bf16.msra.mxu0 0
    %324 = vmatprep.subr.bf16.mxu0 0
    %325 = vmatpush1.bf16.msra.mxu0 0
    %326 = vmatprep.subr.bf16.mxu0 0
    %327 = vmatpush1.bf16.msra.mxu0 0
    %328 = vmatprep.subr.bf16.mxu0 0
    %329 = vmatpush1.bf16.msra.mxu0 0
    %330 = vmatprep.subr.bf16.mxu0 0
    %331 = vmatpush1.bf16.msra.mxu0 0
    %332 = vmatprep.subr.bf16.mxu0 0
    %333 = vmatpush1.bf16.msra.mxu0 0
    %334 = vmatprep.subr.bf16.mxu0 0
    %335 = vmatpush1.bf16.msra.mxu0 0
    %336 = vmatprep.subr.bf16.mxu0 0
    %337 = vmatpush1.bf16.msra.mxu0 0
    %338 = vmatprep.subr.bf16.mxu0 0
    %339 = vmatpush1.bf16.msra.mxu0 0
    %340 = vmatprep.subr.bf16.mxu0 0
    %341 = vmatpush1.bf16.msra.mxu0 0
    %342 = vmatprep.subr.bf16.mxu0 0
    %343 = vmatpush1.bf16.msra.mxu0 0
    %344 = vmatprep.subr.bf16.mxu0 0
    %345 = vmatpush1.bf16.msra.mxu0 0
    %346 = vmatprep.mubr.bf16.mxu0 0
    %347 = vmatmul.mubr.bf16.gmra.mrb[0].mxu0 %v271
    %v348 = vpop.f32.mrb[0].mxu0
    %v349 = vadd.f32 %v220, %v348
    %v350 = vpop.f32.mrb[0].mxu0
    %v351 = vadd.f32 %v224, %v350
    %v352 = vpop.f32.mrb[0].mxu0
    %v353 = vpop.f32.mrb[0].mxu0
    %354 = vdwg.mxu0
    %v355 = vpack.c.bf16 %v308, %v308
    %v356 = vpack.c.bf16 %v310, %v310
    %v357 = vpack.c.bf16 %v349, %v349
    %v358 = vpack.c.bf16 %v351, %v351
    %v359 = vld [vmem:[#allocation9] sm:$0xff]
    %v360 = vld [vmem:[#allocation9 + $0x8] sm:$0xff]
    %v361 = vld [vmem:[#allocation9 + $0x10] sm:$0xff]
    %v362 = vld [vmem:[#allocation9 + $0x18] sm:$0xff]
    %v363 = vld [vmem:[#allocation9 + $0x20] sm:$0xff]
    %v364 = vld [vmem:[#allocation9 + $0x28] sm:$0xff]
    %v365 = vld [vmem:[#allocation9 + $0x30] sm:$0xff]
    %v366 = vld [vmem:[#allocation9 + $0x38] sm:$0xff]
    %v367 = vld [vmem:[#allocation9 + $0x40] sm:$0xff]
    %v368 = vld [vmem:[#allocation9 + $0x48] sm:$0xff]
    %v369 = vld [vmem:[#allocation9 + $0x50] sm:$0xff]
    %v370 = vld [vmem:[#allocation9 + $0x58] sm:$0xff]
    %v371 = vld [vmem:[#allocation9 + $0x60] sm:$0xff]
    %v372 = vld [vmem:[#allocation9 + $0x68] sm:$0xff]
    %v373 = vld [vmem:[#allocation9 + $0x70] sm:$0xff]
    %v374 = vld [vmem:[#allocation9 + $0x78] sm:$0xff]
    %v375 = vld [vmem:[#allocation9 + $0x80] sm:$0xff]
    %v376 = vld [vmem:[#allocation9 + $0x88] sm:$0xff]
    %v377 = vld [vmem:[#allocation9 + $0x90] sm:$0xff]
    %v378 = vld [vmem:[#allocation9 + $0x98] sm:$0xff]
    %v379 = vld [vmem:[#allocation9 + $0xa0] sm:$0xff]
    %v380 = vld [vmem:[#allocation9 + $0xa8] sm:$0xff]
    %v381 = vld [vmem:[#allocation9 + $0xb0] sm:$0xff]
    %v382 = vld [vmem:[#allocation9 + $0xb8] sm:$0xff]
    %v383 = vld [vmem:[#allocation9 + $0xc0] sm:$0xff]
    %v384 = vld [vmem:[#allocation9 + $0xc8] sm:$0xff]
    %v385 = vld [vmem:[#allocation9 + $0xd0] sm:$0xff]
    %v386 = vld [vmem:[#allocation9 + $0xd8] sm:$0xff]
    %v387 = vld [vmem:[#allocation9 + $0xe0] sm:$0xff]
    %v388 = vld [vmem:[#allocation9 + $0xe8] sm:$0xff]
    %v389 = vld [vmem:[#allocation9 + $0xf0] sm:$0xff]
    %v390 = vld [vmem:[#allocation9 + $0xf8] sm:$0xff]
    %v391 = vld [vmem:[#allocation9 + $0x100] sm:$0xff]
    %v392 = vld [vmem:[#allocation9 + $0x108] sm:$0xff]
    %v393 = vld [vmem:[#allocation9 + $0x110] sm:$0xff]
    %v394 = vld [vmem:[#allocation9 + $0x118] sm:$0xff]
    %v395 = vld [vmem:[#allocation9 + $0x120] sm:$0xff]
    %v396 = vld [vmem:[#allocation9 + $0x128] sm:$0xff]
    %v397 = vld [vmem:[#allocation9 + $0x130] sm:$0xff]
    %v398 = vld [vmem:[#allocation9 + $0x138] sm:$0xff]
    %v399 = vld [vmem:[#allocation9 + $0x140] sm:$0xff]
    %v400 = vld [vmem:[#allocation9 + $0x148] sm:$0xff]
    %v401 = vld [vmem:[#allocation9 + $0x150] sm:$0xff]
    %v402 = vld [vmem:[#allocation9 + $0x158] sm:$0xff]
    %v403 = vld [vmem:[#allocation9 + $0x160] sm:$0xff]
    %v404 = vld [vmem:[#allocation9 + $0x168] sm:$0xff]
    %v405 = vld [vmem:[#allocation9 + $0x170] sm:$0xff]
    %v406 = vld [vmem:[#allocation9 + $0x178] sm:$0xff]
    %v407 = vld [vmem:[#allocation9 + $0x180] sm:$0xff]
    %v408 = vld [vmem:[#allocation9 + $0x188] sm:$0xff]
    %v409 = vld [vmem:[#allocation9 + $0x190] sm:$0xff]
    %v410 = vld [vmem:[#allocation9 + $0x198] sm:$0xff]
    %v411 = vld [vmem:[#allocation9 + $0x1a0] sm:$0xff]
    %v412 = vld [vmem:[#allocation9 + $0x1a8] sm:$0xff]
    %v413 = vld [vmem:[#allocation9 + $0x1b0] sm:$0xff]
    %v414 = vld [vmem:[#allocation9 + $0x1b8] sm:$0xff]
    %v415 = vld [vmem:[#allocation9 + $0x1c0] sm:$0xff]
    %v416 = vld [vmem:[#allocation9 + $0x1c8] sm:$0xff]
    %v417 = vld [vmem:[#allocation9 + $0x1d0] sm:$0xff]
    %v418 = vld [vmem:[#allocation9 + $0x1d8] sm:$0xff]
    %v419 = vld [vmem:[#allocation9 + $0x1e0] sm:$0xff]
    %v420 = vld [vmem:[#allocation9 + $0x1e8] sm:$0xff]
    %v421 = vld [vmem:[#allocation9 + $0x1f0] sm:$0xff]
    %v422 = vld [vmem:[#allocation9 + $0x1f8] sm:$0xff]
    %v423 = vld [vmem:[#allocation11] sm:$0x3]
    %v425 = vlaneseq
    %v426 = vshrl.u32 %v425, 7
    %v427 = vsub.s32 0, %v426
    %v428 = vrot.slane %v423, %v427
    %v429 = vlaneseq
    %v430 = vshrl.u32 %v429, 7
    %v431 = vsub.s32 1, %v430
    %v432 = vrot.slane %v423, %v431
    %v499 = vunpack.c.l.b16 %v359
    %v500 = vunpack.c.h.b16 %v359
    %v501 = vunpack.c.l.b16 %v360
    %v502 = vunpack.c.h.b16 %v360
    %v503 = vunpack.c.l.b16 %v361
    %v504 = vunpack.c.h.b16 %v361
    %v505 = vunpack.c.l.b16 %v362
    %v506 = vunpack.c.h.b16 %v362
    %v507 = vunpack.c.l.b16 %v363
    %v508 = vunpack.c.h.b16 %v363
    %v509 = vunpack.c.l.b16 %v364
    %v510 = vunpack.c.h.b16 %v364
    %v511 = vunpack.c.l.b16 %v365
    %v512 = vunpack.c.h.b16 %v365
    %v513 = vunpack.c.l.b16 %v366
    %v514 = vunpack.c.h.b16 %v366
    %v515 = vunpack.c.l.b16 %v367
    %v516 = vunpack.c.h.b16 %v367
    %v517 = vunpack.c.l.b16 %v368
    %v518 = vunpack.c.h.b16 %v368
    %v519 = vunpack.c.l.b16 %v369
    %v520 = vunpack.c.h.b16 %v369
    %v521 = vunpack.c.l.b16 %v370
    %v522 = vunpack.c.h.b16 %v370
    %v523 = vunpack.c.l.b16 %v371
    %v524 = vunpack.c.h.b16 %v371
    %v525 = vunpack.c.l.b16 %v372
    %v526 = vunpack.c.h.b16 %v372
    %v527 = vunpack.c.l.b16 %v373
    %v528 = vunpack.c.h.b16 %v373
    %v529 = vunpack.c.l.b16 %v374
    %v530 = vunpack.c.h.b16 %v374
    %v531 = vunpack.c.l.b16 %v375
    %v532 = vunpack.c.h.b16 %v375
    %v533 = vunpack.c.l.b16 %v376
    %v534 = vunpack.c.h.b16 %v376
    %v535 = vunpack.c.l.b16 %v377
    %v536 = vunpack.c.h.b16 %v377
    %v537 = vunpack.c.l.b16 %v378
    %v538 = vunpack.c.h.b16 %v378
    %v539 = vunpack.c.l.b16 %v379
    %v540 = vunpack.c.h.b16 %v379
    %v541 = vunpack.c.l.b16 %v380
    %v542 = vunpack.c.h.b16 %v380
    %v543 = vunpack.c.l.b16 %v381
    %v544 = vunpack.c.h.b16 %v381
    %v545 = vunpack.c.l.b16 %v382
    %v546 = vunpack.c.h.b16 %v382
    %v547 = vunpack.c.l.b16 %v383
    %v548 = vunpack.c.h.b16 %v383
    %v549 = vunpack.c.l.b16 %v384
    %v550 = vunpack.c.h.b16 %v384
    %v551 = vunpack.c.l.b16 %v385
    %v552 = vunpack.c.h.b16 %v385
    %v553 = vunpack.c.l.b16 %v386
    %v554 = vunpack.c.h.b16 %v386
    %v555 = vunpack.c.l.b16 %v387
    %v556 = vunpack.c.h.b16 %v387
    %v557 = vunpack.c.l.b16 %v388
    %v558 = vunpack.c.h.b16 %v388
    %v559 = vunpack.c.l.b16 %v389
    %v560 = vunpack.c.h.b16 %v389
    %v561 = vunpack.c.l.b16 %v390
    %v562 = vunpack.c.h.b16 %v390
    %v563 = vunpack.c.l.b16 %v391
    %v564 = vunpack.c.h.b16 %v391
    %v565 = vunpack.c.l.b16 %v392
    %v566 = vunpack.c.h.b16 %v392
    %v567 = vunpack.c.l.b16 %v393
    %v568 = vunpack.c.h.b16 %v393
    %v569 = vunpack.c.l.b16 %v394
    %v570 = vunpack.c.h.b16 %v394
    %v571 = vunpack.c.l.b16 %v395
    %v572 = vunpack.c.h.b16 %v395
    %v573 = vunpack.c.l.b16 %v396
    %v574 = vunpack.c.h.b16 %v396
    %v575 = vunpack.c.l.b16 %v397
    %v576 = vunpack.c.h.b16 %v397
    %v577 = vunpack.c.l.b16 %v398
    %v578 = vunpack.c.h.b16 %v398
    %v579 = vunpack.c.l.b16 %v399
    %v580 = vunpack.c.h.b16 %v399
    %v581 = vunpack.c.l.b16 %v400
    %v582 = vunpack.c.h.b16 %v400
    %v583 = vunpack.c.l.b16 %v401
    %v584 = vunpack.c.h.b16 %v401
    %v585 = vunpack.c.l.b16 %v402
    %v586 = vunpack.c.h.b16 %v402
    %v587 = vunpack.c.l.b16 %v403
    %v588 = vunpack.c.h.b16 %v403
    %v589 = vunpack.c.l.b16 %v404
    %v590 = vunpack.c.h.b16 %v404
    %v591 = vunpack.c.l.b16 %v405
    %v592 = vunpack.c.h.b16 %v405
    %v593 = vunpack.c.l.b16 %v406
    %v594 = vunpack.c.h.b16 %v406
    %v595 = vunpack.c.l.b16 %v407
    %v596 = vunpack.c.h.b16 %v407
    %v597 = vunpack.c.l.b16 %v408
    %v598 = vunpack.c.h.b16 %v408
    %v599 = vunpack.c.l.b16 %v409
    %v600 = vunpack.c.h.b16 %v409
    %v601 = vunpack.c.l.b16 %v410
    %v602 = vunpack.c.h.b16 %v410
    %v603 = vunpack.c.l.b16 %v411
    %v604 = vunpack.c.h.b16 %v411
    %v605 = vunpack.c.l.b16 %v412
    %v606 = vunpack.c.h.b16 %v412
    %v607 = vunpack.c.l.b16 %v413
    %v608 = vunpack.c.h.b16 %v413
    %v609 = vunpack.c.l.b16 %v414
    %v610 = vunpack.c.h.b16 %v414
    %v611 = vunpack.c.l.b16 %v415
    %v612 = vunpack.c.h.b16 %v415
    %v613 = vunpack.c.l.b16 %v416
    %v614 = vunpack.c.h.b16 %v416
    %v615 = vunpack.c.l.b16 %v417
    %v616 = vunpack.c.h.b16 %v417
    %v617 = vunpack.c.l.b16 %v418
    %v618 = vunpack.c.h.b16 %v418
    %v619 = vunpack.c.l.b16 %v419
    %v620 = vunpack.c.h.b16 %v419
    %v621 = vunpack.c.l.b16 %v420
    %v622 = vunpack.c.h.b16 %v420
    %v623 = vunpack.c.l.b16 %v421
    %v624 = vunpack.c.h.b16 %v421
    %v625 = vunpack.c.l.b16 %v422
    %v626 = vunpack.c.h.b16 %v422
    %v627 = vpack.c.b16 %v501, %v499
    %v628 = vpack.c.b16 %v502, %v500
    %v629 = vpack.c.b16 %v505, %v503
    %v630 = vpack.c.b16 %v506, %v504
    %v631 = vpack.c.b16 %v509, %v507
    %v632 = vpack.c.b16 %v510, %v508
    %v633 = vpack.c.b16 %v513, %v511
    %v634 = vpack.c.b16 %v514, %v512
    %v635 = vpack.c.b16 %v517, %v515
    %v636 = vpack.c.b16 %v518, %v516
    %v637 = vpack.c.b16 %v521, %v519
    %v638 = vpack.c.b16 %v522, %v520
    %v639 = vpack.c.b16 %v525, %v523
    %v640 = vpack.c.b16 %v526, %v524
    %v641 = vpack.c.b16 %v529, %v527
    %v642 = vpack.c.b16 %v530, %v528
    %v643 = vpack.c.b16 %v533, %v531
    %v644 = vpack.c.b16 %v534, %v532
    %v645 = vpack.c.b16 %v537, %v535
    %v646 = vpack.c.b16 %v538, %v536
    %v647 = vpack.c.b16 %v541, %v539
    %v648 = vpack.c.b16 %v542, %v540
    %v649 = vpack.c.b16 %v545, %v543
    %v650 = vpack.c.b16 %v546, %v544
    %v651 = vpack.c.b16 %v549, %v547
    %v652 = vpack.c.b16 %v550, %v548
    %v653 = vpack.c.b16 %v553, %v551
    %v654 = vpack.c.b16 %v554, %v552
    %v655 = vpack.c.b16 %v557, %v555
    %v656 = vpack.c.b16 %v558, %v556
    %v657 = vpack.c.b16 %v561, %v559
    %v658 = vpack.c.b16 %v562, %v560
    %v659 = vpack.c.b16 %v565, %v563
    %v660 = vpack.c.b16 %v566, %v564
    %v661 = vpack.c.b16 %v569, %v567
    %v662 = vpack.c.b16 %v570, %v568
    %v663 = vpack.c.b16 %v573, %v571
    %v664 = vpack.c.b16 %v574, %v572
    %v665 = vpack.c.b16 %v577, %v575
    %v666 = vpack.c.b16 %v578, %v576
    %v667 = vpack.c.b16 %v581, %v579
    %v668 = vpack.c.b16 %v582, %v580
    %v669 = vpack.c.b16 %v585, %v583
    %v670 = vpack.c.b16 %v586, %v584
    %v671 = vpack.c.b16 %v589, %v587
    %v672 = vpack.c.b16 %v590, %v588
    %v673 = vpack.c.b16 %v593, %v591
    %v674 = vpack.c.b16 %v594, %v592
    %v675 = vpack.c.b16 %v597, %v595
    %v676 = vpack.c.b16 %v598, %v596
    %v677 = vpack.c.b16 %v601, %v599
    %v678 = vpack.c.b16 %v602, %v600
    %v679 = vpack.c.b16 %v605, %v603
    %v680 = vpack.c.b16 %v606, %v604
    %v681 = vpack.c.b16 %v609, %v607
    %v682 = vpack.c.b16 %v610, %v608
    %v683 = vpack.c.b16 %v613, %v611
    %v684 = vpack.c.b16 %v614, %v612
    %v685 = vpack.c.b16 %v617, %v615
    %v686 = vpack.c.b16 %v618, %v616
    %v687 = vpack.c.b16 %v621, %v619
    %v688 = vpack.c.b16 %v622, %v620
    %v689 = vpack.c.b16 %v625, %v623
    %v690 = vpack.c.b16 %v626, %v624
    %755 = vmatprep.subr.bf16.mxu0 %v628
    %756 = vmatpush1.bf16.msra.mxu0 %v627
    %757 = vmatprep.subr.bf16.mxu0 %v630
    %758 = vmatpush1.bf16.msra.mxu0 %v629
    %759 = vmatprep.subr.bf16.mxu0 %v632
    %760 = vmatpush1.bf16.msra.mxu0 %v631
    %761 = vmatprep.subr.bf16.mxu0 %v634
    %762 = vmatpush1.bf16.msra.mxu0 %v633
    %763 = vmatprep.subr.bf16.mxu0 %v636
    %764 = vmatpush1.bf16.msra.mxu0 %v635
    %765 = vmatprep.subr.bf16.mxu0 %v638
    %766 = vmatpush1.bf16.msra.mxu0 %v637
    %767 = vmatprep.subr.bf16.mxu0 %v640
    %768 = vmatpush1.bf16.msra.mxu0 %v639
    %769 = vmatprep.subr.bf16.mxu0 %v642
    %770 = vmatpush1.bf16.msra.mxu0 %v641
    %771 = vmatprep.subr.bf16.mxu0 %v644
    %772 = vmatpush1.bf16.msra.mxu0 %v643
    %773 = vmatprep.subr.bf16.mxu0 %v646
    %774 = vmatpush1.bf16.msra.mxu0 %v645
    %775 = vmatprep.subr.bf16.mxu0 %v648
    %776 = vmatpush1.bf16.msra.mxu0 %v647
    %777 = vmatprep.subr.bf16.mxu0 %v650
    %778 = vmatpush1.bf16.msra.mxu0 %v649
    %779 = vmatprep.subr.bf16.mxu0 %v652
    %780 = vmatpush1.bf16.msra.mxu0 %v651
    %781 = vmatprep.subr.bf16.mxu0 %v654
    %782 = vmatpush1.bf16.msra.mxu0 %v653
    %783 = vmatprep.subr.bf16.mxu0 %v656
    %784 = vmatpush1.bf16.msra.mxu0 %v655
    %785 = vmatprep.subr.bf16.mxu0 %v658
    %786 = vmatpush1.bf16.msra.mxu0 %v657
    %787 = vmatprep.mubr.bf16.mxu0 %v356
    %788 = vmatmul.mubr.bf16.gmra.mrb[0].mxu0 %v355
    %v789 = vpop.f32.mrb[0].mxu0
    %v790 = vadd.f32 %v428, %v789
    %v791 = vpop.f32.mrb[0].mxu0
    %v792 = vadd.f32 %v432, %v791
    %v793 = vpop.f32.mrb[0].mxu0
    %v794 = vpop.f32.mrb[0].mxu0
    %795 = vdwg.mxu0
    %796 = vmatprep.subr.bf16.mxu0 %v660
    %797 = vmatpush1.bf16.msra.mxu0 %v659
    %798 = vmatprep.subr.bf16.mxu0 %v662
    %799 = vmatpush1.bf16.msra.mxu0 %v661
    %800 = vmatprep.subr.bf16.mxu0 %v664
    %801 = vmatpush1.bf16.msra.mxu0 %v663
    %802 = vmatprep.subr.bf16.mxu0 %v666
    %803 = vmatpush1.bf16.msra.mxu0 %v665
    %804 = vmatprep.subr.bf16.mxu0 %v668
    %805 = vmatpush1.bf16.msra.mxu0 %v667
    %806 = vmatprep.subr.bf16.mxu0 %v670
    %807 = vmatpush1.bf16.msra.mxu0 %v669
    %808 = vmatprep.subr.bf16.mxu0 %v672
    %809 = vmatpush1.bf16.msra.mxu0 %v671
    %810 = vmatprep.subr.bf16.mxu0 %v674
    %811 = vmatpush1.bf16.msra.mxu0 %v673
    %812 = vmatprep.subr.bf16.mxu0 %v676
    %813 = vmatpush1.bf16.msra.mxu0 %v675
    %814 = vmatprep.subr.bf16.mxu0 %v678
    %815 = vmatpush1.bf16.msra.mxu0 %v677
    %816 = vmatprep.subr.bf16.mxu0 %v680
    %817 = vmatpush1.bf16.msra.mxu0 %v679
    %818 = vmatprep.subr.bf16.mxu0 %v682
    %819 = vmatpush1.bf16.msra.mxu0 %v681
    %820 = vmatprep.subr.bf16.mxu0 %v684
    %821 = vmatpush1.bf16.msra.mxu0 %v683
    %822 = vmatprep.subr.bf16.mxu0 %v686
    %823 = vmatpush1.bf16.msra.mxu0 %v685
    %824 = vmatprep.subr.bf16.mxu0 %v688
    %825 = vmatpush1.bf16.msra.mxu0 %v687
    %826 = vmatprep.subr.bf16.mxu0 %v690
    %827 = vmatpush1.bf16.msra.mxu0 %v689
    %828 = vmatprep.mubr.bf16.mxu0 %v358
    %829 = vmatmul.mubr.bf16.gmra.mrb[0].mxu0 %v357
    %v830 = vpop.f32.mrb[0].mxu0
    %v831 = vadd.f32 %v790, %v830
    %v832 = vpop.f32.mrb[0].mxu0
    %v833 = vadd.f32 %v792, %v832
    %v834 = vpop.f32.mrb[0].mxu0
    %v835 = vpop.f32.mrb[0].mxu0
    %836 = vdwg.mxu0
    %v837 = vtanh.pop %v831
    %v838 = vtanh.pop %v833
    %v839 = vpack.c.bf16 %v837, %v837
    %v840 = vpack.c.bf16 %v838, %v838
    %v841 = vld [vmem:[#allocation12] sm:$0xff]
    %v842 = vld [vmem:[#allocation12 + $0x8] sm:$0xff]
    %v843 = vld [vmem:[#allocation12 + $0x10] sm:$0xff]
    %v844 = vld [vmem:[#allocation12 + $0x18] sm:$0xff]
    %v845 = vld [vmem:[#allocation12 + $0x20] sm:$0xff]
    %v846 = vld [vmem:[#allocation12 + $0x28] sm:$0xff]
    %v847 = vld [vmem:[#allocation12 + $0x30] sm:$0xff]
    %v848 = vld [vmem:[#allocation12 + $0x38] sm:$0xff]
    %v849 = vld [vmem:[#allocation12 + $0x40] sm:$0xff]
    %v850 = vld [vmem:[#allocation12 + $0x48] sm:$0xff]
    %v851 = vld [vmem:[#allocation12 + $0x50] sm:$0xff]
    %v852 = vld [vmem:[#allocation12 + $0x58] sm:$0xff]
    %v853 = vld [vmem:[#allocation12 + $0x60] sm:$0xff]
    %v854 = vld [vmem:[#allocation12 + $0x68] sm:$0xff]
    %v855 = vld [vmem:[#allocation12 + $0x70] sm:$0xff]
    %v856 = vld [vmem:[#allocation12 + $0x78] sm:$0xff]
    %v857 = vld [vmem:[#allocation12 + $0x80] sm:$0xff]
    %v858 = vld [vmem:[#allocation12 + $0x88] sm:$0xff]
    %v859 = vld [vmem:[#allocation12 + $0x90] sm:$0xff]
    %v860 = vld [vmem:[#allocation12 + $0x98] sm:$0xff]
    %v861 = vld [vmem:[#allocation12 + $0xa0] sm:$0xff]
    %v862 = vld [vmem:[#allocation12 + $0xa8] sm:$0xff]
    %v863 = vld [vmem:[#allocation12 + $0xb0] sm:$0xff]
    %v864 = vld [vmem:[#allocation12 + $0xb8] sm:$0xff]
    %v865 = vld [vmem:[#allocation12 + $0xc0] sm:$0xff]
    %v866 = vld [vmem:[#allocation12 + $0xc8] sm:$0xff]
    %v867 = vld [vmem:[#allocation12 + $0xd0] sm:$0xff]
    %v868 = vld [vmem:[#allocation12 + $0xd8] sm:$0xff]
    %v869 = vld [vmem:[#allocation12 + $0xe0] sm:$0xff]
    %v870 = vld [vmem:[#allocation12 + $0xe8] sm:$0xff]
    %v871 = vld [vmem:[#allocation12 + $0xf0] sm:$0xff]
    %v872 = vld [vmem:[#allocation12 + $0xf8] sm:$0xff]
    %v873 = vld [vmem:[#allocation14] sm:$0x3]
    %v875 = vlaneseq
    %v876 = vshrl.u32 %v875, 7
    %v877 = vsub.s32 0, %v876
    %v878 = vrot.slane %v873, %v877
    %v879 = vlaneseq
    %v880 = vshrl.u32 %v879, 7
    %v881 = vsub.s32 1, %v880
    %v882 = vrot.slane %v873, %v881
    %v917 = vunpack.c.l.b16 %v841
    %v918 = vunpack.c.h.b16 %v841
    %v919 = vunpack.c.l.b16 %v842
    %v920 = vunpack.c.h.b16 %v842
    %v921 = vunpack.c.l.b16 %v843
    %v922 = vunpack.c.h.b16 %v843
    %v923 = vunpack.c.l.b16 %v844
    %v924 = vunpack.c.h.b16 %v844
    %v925 = vunpack.c.l.b16 %v845
    %v926 = vunpack.c.h.b16 %v845
    %v927 = vunpack.c.l.b16 %v846
    %v928 = vunpack.c.h.b16 %v846
    %v929 = vunpack.c.l.b16 %v847
    %v930 = vunpack.c.h.b16 %v847
    %v931 = vunpack.c.l.b16 %v848
    %v932 = vunpack.c.h.b16 %v848
    %v933 = vunpack.c.l.b16 %v849
    %v934 = vunpack.c.h.b16 %v849
    %v935 = vunpack.c.l.b16 %v850
    %v936 = vunpack.c.h.b16 %v850
    %v937 = vunpack.c.l.b16 %v851
    %v938 = vunpack.c.h.b16 %v851
    %v939 = vunpack.c.l.b16 %v852
    %v940 = vunpack.c.h.b16 %v852
    %v941 = vunpack.c.l.b16 %v853
    %v942 = vunpack.c.h.b16 %v853
    %v943 = vunpack.c.l.b16 %v854
    %v944 = vunpack.c.h.b16 %v854
    %v945 = vunpack.c.l.b16 %v855
    %v946 = vunpack.c.h.b16 %v855
    %v947 = vunpack.c.l.b16 %v856
    %v948 = vunpack.c.h.b16 %v856
    %v949 = vunpack.c.l.b16 %v857
    %v950 = vunpack.c.h.b16 %v857
    %v951 = vunpack.c.l.b16 %v858
    %v952 = vunpack.c.h.b16 %v858
    %v953 = vunpack.c.l.b16 %v859
    %v954 = vunpack.c.h.b16 %v859
    %v955 = vunpack.c.l.b16 %v860
    %v956 = vunpack.c.h.b16 %v860
    %v957 = vunpack.c.l.b16 %v861
    %v958 = vunpack.c.h.b16 %v861
    %v959 = vunpack.c.l.b16 %v862
    %v960 = vunpack.c.h.b16 %v862
    %v961 = vunpack.c.l.b16 %v863
    %v962 = vunpack.c.h.b16 %v863
    %v963 = vunpack.c.l.b16 %v864
    %v964 = vunpack.c.h.b16 %v864
    %v965 = vunpack.c.l.b16 %v865
    %v966 = vunpack.c.h.b16 %v865
    %v967 = vunpack.c.l.b16 %v866
    %v968 = vunpack.c.h.b16 %v866
    %v969 = vunpack.c.l.b16 %v867
    %v970 = vunpack.c.h.b16 %v867
    %v971 = vunpack.c.l.b16 %v868
    %v972 = vunpack.c.h.b16 %v868
    %v973 = vunpack.c.l.b16 %v869
    %v974 = vunpack.c.h.b16 %v869
    %v975 = vunpack.c.l.b16 %v870
    %v976 = vunpack.c.h.b16 %v870
    %v977 = vunpack.c.l.b16 %v871
    %v978 = vunpack.c.h.b16 %v871
    %v979 = vunpack.c.l.b16 %v872
    %v980 = vunpack.c.h.b16 %v872
    %v981 = vpack.c.b16 %v919, %v917
    %v982 = vpack.c.b16 %v920, %v918
    %v983 = vpack.c.b16 %v923, %v921
    %v984 = vpack.c.b16 %v924, %v922
    %v985 = vpack.c.b16 %v927, %v925
    %v986 = vpack.c.b16 %v928, %v926
    %v987 = vpack.c.b16 %v931, %v929
    %v988 = vpack.c.b16 %v932, %v930
    %v989 = vpack.c.b16 %v935, %v933
    %v990 = vpack.c.b16 %v936, %v934
    %v991 = vpack.c.b16 %v939, %v937
    %v992 = vpack.c.b16 %v940, %v938
    %v993 = vpack.c.b16 %v943, %v941
    %v994 = vpack.c.b16 %v944, %v942
    %v995 = vpack.c.b16 %v947, %v945
    %v996 = vpack.c.b16 %v948, %v946
    %v997 = vpack.c.b16 %v951, %v949
    %v998 = vpack.c.b16 %v952, %v950
    %v999 = vpack.c.b16 %v955, %v953
    %v1000 = vpack.c.b16 %v956, %v954
    %v1001 = vpack.c.b16 %v959, %v957
    %v1002 = vpack.c.b16 %v960, %v958
    %v1003 = vpack.c.b16 %v963, %v961
    %v1004 = vpack.c.b16 %v964, %v962
    %v1005 = vpack.c.b16 %v967, %v965
    %v1006 = vpack.c.b16 %v968, %v966
    %v1007 = vpack.c.b16 %v971, %v969
    %v1008 = vpack.c.b16 %v972, %v970
    %v1009 = vpack.c.b16 %v975, %v973
    %v1010 = vpack.c.b16 %v976, %v974
    %v1011 = vpack.c.b16 %v979, %v977
    %v1012 = vpack.c.b16 %v980, %v978
    %1045 = vmatprep.subr.bf16.mxu0 %v982
    %1046 = vmatpush1.bf16.msra.mxu0 %v981
    %1047 = vmatprep.subr.bf16.mxu0 %v984
    %1048 = vmatpush1.bf16.msra.mxu0 %v983
    %1049 = vmatprep.subr.bf16.mxu0 %v986
    %1050 = vmatpush1.bf16.msra.mxu0 %v985
    %1051 = vmatprep.subr.bf16.mxu0 %v988
    %1052 = vmatpush1.bf16.msra.mxu0 %v987
    %1053 = vmatprep.subr.bf16.mxu0 %v990
    %1054 = vmatpush1.bf16.msra.mxu0 %v989
    %1055 = vmatprep.subr.bf16.mxu0 %v992
    %1056 = vmatpush1.bf16.msra.mxu0 %v991
    %1057 = vmatprep.subr.bf16.mxu0 %v994
    %1058 = vmatpush1.bf16.msra.mxu0 %v993
    %1059 = vmatprep.subr.bf16.mxu0 %v996
    %1060 = vmatpush1.bf16.msra.mxu0 %v995
    %1061 = vmatprep.subr.bf16.mxu0 %v998
    %1062 = vmatpush1.bf16.msra.mxu0 %v997
    %1063 = vmatprep.subr.bf16.mxu0 %v1000
    %1064 = vmatpush1.bf16.msra.mxu0 %v999
    %1065 = vmatprep.subr.bf16.mxu0 %v1002
    %1066 = vmatpush1.bf16.msra.mxu0 %v1001
    %1067 = vmatprep.subr.bf16.mxu0 %v1004
    %1068 = vmatpush1.bf16.msra.mxu0 %v1003
    %1069 = vmatprep.subr.bf16.mxu0 %v1006
    %1070 = vmatpush1.bf16.msra.mxu0 %v1005
    %1071 = vmatprep.subr.bf16.mxu0 %v1008
    %1072 = vmatpush1.bf16.msra.mxu0 %v1007
    %1073 = vmatprep.subr.bf16.mxu0 %v1010
    %1074 = vmatpush1.bf16.msra.mxu0 %v1009
    %1075 = vmatprep.subr.bf16.mxu0 %v1012
    %1076 = vmatpush1.bf16.msra.mxu0 %v1011
    %1077 = vmatprep.mubr.bf16.mxu0 %v840
    %1078 = vmatmul.mubr.bf16.gmra.mrb[0].mxu0 %v839
    %v1079 = vpop.f32.mrb[0].mxu0
    %v1080 = vadd.f32 %v878, %v1079
    %v1081 = vpop.f32.mrb[0].mxu0
    %v1082 = vadd.f32 %v882, %v1081
    %v1083 = vpop.f32.mrb[0].mxu0
    %v1084 = vpop.f32.mrb[0].mxu0
    %1085 = vdwg.mxu0
    %v1086 = vtanh.pop %v1080
    %v1087 = vtanh.pop %v1082
    %v1088 = vpack.c.bf16 %v1086, %v1086
    %v1089 = vpack.c.bf16 %v1087, %v1087
    %v1090 = vld [vmem:[#allocation15] sm:$0xff]
    %v1091 = vld [vmem:[#allocation15 + $0x8] sm:$0xff]
    %v1092 = vld [vmem:[#allocation15 + $0x10] sm:$0xff]
    %v1093 = vld [vmem:[#allocation15 + $0x18] sm:$0xff]
    %v1094 = vld [vmem:[#allocation15 + $0x20] sm:$0xff]
    %v1095 = vld [vmem:[#allocation15 + $0x28] sm:$0xff]
    %v1096 = vld [vmem:[#allocation15 + $0x30] sm:$0xff]
    %v1097 = vld [vmem:[#allocation15 + $0x38] sm:$0xff]
    %v1098 = vld [vmem:[#allocation15 + $0x40] sm:$0xff]
    %v1099 = vld [vmem:[#allocation15 + $0x48] sm:$0xff]
    %v1100 = vld [vmem:[#allocation15 + $0x50] sm:$0xff]
    %v1101 = vld [vmem:[#allocation15 + $0x58] sm:$0xff]
    %v1102 = vld [vmem:[#allocation15 + $0x60] sm:$0xff]
    %v1103 = vld [vmem:[#allocation15 + $0x68] sm:$0xff]
    %v1104 = vld [vmem:[#allocation15 + $0x70] sm:$0xff]
    %v1105 = vld [vmem:[#allocation15 + $0x78] sm:$0xff]
    %v1106 = vld [vmem:[#allocation15 + $0x80] sm:$0xff]
    %v1107 = vld [vmem:[#allocation15 + $0x88] sm:$0xff]
    %v1108 = vld [vmem:[#allocation15 + $0x90] sm:$0xff]
    %v1109 = vld [vmem:[#allocation15 + $0x98] sm:$0xff]
    %v1110 = vld [vmem:[#allocation15 + $0xa0] sm:$0xff]
    %v1111 = vld [vmem:[#allocation15 + $0xa8] sm:$0xff]
    %v1112 = vld [vmem:[#allocation15 + $0xb0] sm:$0xff]
    %v1113 = vld [vmem:[#allocation15 + $0xb8] sm:$0xff]
    %v1114 = vld [vmem:[#allocation15 + $0xc0] sm:$0xff]
    %v1115 = vld [vmem:[#allocation15 + $0xc8] sm:$0xff]
    %v1116 = vld [vmem:[#allocation15 + $0xd0] sm:$0xff]
    %v1117 = vld [vmem:[#allocation15 + $0xd8] sm:$0xff]
    %v1118 = vld [vmem:[#allocation15 + $0xe0] sm:$0xff]
    %v1119 = vld [vmem:[#allocation15 + $0xe8] sm:$0xff]
    %v1120 = vld [vmem:[#allocation15 + $0xf0] sm:$0xff]
    %v1121 = vld [vmem:[#allocation15 + $0xf8] sm:$0xff]
    %v1122 = vld [vmem:[#allocation17] sm:$0x3]
    %v1124 = vlaneseq
    %v1125 = vshrl.u32 %v1124, 7
    %v1126 = vsub.s32 0, %v1125
    %v1127 = vrot.slane %v1122, %v1126
    %v1128 = vlaneseq
    %v1129 = vshrl.u32 %v1128, 7
    %v1130 = vsub.s32 1, %v1129
    %v1131 = vrot.slane %v1122, %v1130
    %v1166 = vunpack.c.l.b16 %v1090
    %v1167 = vunpack.c.h.b16 %v1090
    %v1168 = vunpack.c.l.b16 %v1091
    %v1169 = vunpack.c.h.b16 %v1091
    %v1170 = vunpack.c.l.b16 %v1092
    %v1171 = vunpack.c.h.b16 %v1092
    %v1172 = vunpack.c.l.b16 %v1093
    %v1173 = vunpack.c.h.b16 %v1093
    %v1174 = vunpack.c.l.b16 %v1094
    %v1175 = vunpack.c.h.b16 %v1094
    %v1176 = vunpack.c.l.b16 %v1095
    %v1177 = vunpack.c.h.b16 %v1095
    %v1178 = vunpack.c.l.b16 %v1096
    %v1179 = vunpack.c.h.b16 %v1096
    %v1180 = vunpack.c.l.b16 %v1097
    %v1181 = vunpack.c.h.b16 %v1097
    %v1182 = vunpack.c.l.b16 %v1098
    %v1183 = vunpack.c.h.b16 %v1098
    %v1184 = vunpack.c.l.b16 %v1099
    %v1185 = vunpack.c.h.b16 %v1099
    %v1186 = vunpack.c.l.b16 %v1100
    %v1187 = vunpack.c.h.b16 %v1100
    %v1188 = vunpack.c.l.b16 %v1101
    %v1189 = vunpack.c.h.b16 %v1101
    %v1190 = vunpack.c.l.b16 %v1102
    %v1191 = vunpack.c.h.b16 %v1102
    %v1192 = vunpack.c.l.b16 %v1103
    %v1193 = vunpack.c.h.b16 %v1103
    %v1194 = vunpack.c.l.b16 %v1104
    %v1195 = vunpack.c.h.b16 %v1104
    %v1196 = vunpack.c.l.b16 %v1105
    %v1197 = vunpack.c.h.b16 %v1105
    %v1198 = vunpack.c.l.b16 %v1106
    %v1199 = vunpack.c.h.b16 %v1106
    %v1200 = vunpack.c.l.b16 %v1107
    %v1201 = vunpack.c.h.b16 %v1107
    %v1202 = vunpack.c.l.b16 %v1108
    %v1203 = vunpack.c.h.b16 %v1108
    %v1204 = vunpack.c.l.b16 %v1109
    %v1205 = vunpack.c.h.b16 %v1109
    %v1206 = vunpack.c.l.b16 %v1110
    %v1207 = vunpack.c.h.b16 %v1110
    %v1208 = vunpack.c.l.b16 %v1111
    %v1209 = vunpack.c.h.b16 %v1111
    %v1210 = vunpack.c.l.b16 %v1112
    %v1211 = vunpack.c.h.b16 %v1112
    %v1212 = vunpack.c.l.b16 %v1113
    %v1213 = vunpack.c.h.b16 %v1113
    %v1214 = vunpack.c.l.b16 %v1114
    %v1215 = vunpack.c.h.b16 %v1114
    %v1216 = vunpack.c.l.b16 %v1115
    %v1217 = vunpack.c.h.b16 %v1115
    %v1218 = vunpack.c.l.b16 %v1116
    %v1219 = vunpack.c.h.b16 %v1116
    %v1220 = vunpack.c.l.b16 %v1117
    %v1221 = vunpack.c.h.b16 %v1117
    %v1222 = vunpack.c.l.b16 %v1118
    %v1223 = vunpack.c.h.b16 %v1118
    %v1224 = vunpack.c.l.b16 %v1119
    %v1225 = vunpack.c.h.b16 %v1119
    %v1226 = vunpack.c.l.b16 %v1120
    %v1227 = vunpack.c.h.b16 %v1120
    %v1228 = vunpack.c.l.b16 %v1121
    %v1229 = vunpack.c.h.b16 %v1121
    %v1230 = vpack.c.b16 %v1168, %v1166
    %v1231 = vpack.c.b16 %v1169, %v1167
    %v1232 = vpack.c.b16 %v1172, %v1170
    %v1233 = vpack.c.b16 %v1173, %v1171
    %v1234 = vpack.c.b16 %v1176, %v1174
    %v1235 = vpack.c.b16 %v1177, %v1175
    %v1236 = vpack.c.b16 %v1180, %v1178
    %v1237 = vpack.c.b16 %v1181, %v1179
    %v1238 = vpack.c.b16 %v1184, %v1182
    %v1239 = vpack.c.b16 %v1185, %v1183
    %v1240 = vpack.c.b16 %v1188, %v1186
    %v1241 = vpack.c.b16 %v1189, %v1187
    %v1242 = vpack.c.b16 %v1192, %v1190
    %v1243 = vpack.c.b16 %v1193, %v1191
    %v1244 = vpack.c.b16 %v1196, %v1194
    %v1245 = vpack.c.b16 %v1197, %v1195
    %v1246 = vpack.c.b16 %v1200, %v1198
    %v1247 = vpack.c.b16 %v1201, %v1199
    %v1248 = vpack.c.b16 %v1204, %v1202
    %v1249 = vpack.c.b16 %v1205, %v1203
    %v1250 = vpack.c.b16 %v1208, %v1206
    %v1251 = vpack.c.b16 %v1209, %v1207
    %v1252 = vpack.c.b16 %v1212, %v1210
    %v1253 = vpack.c.b16 %v1213, %v1211
    %v1254 = vpack.c.b16 %v1216, %v1214
    %v1255 = vpack.c.b16 %v1217, %v1215
    %v1256 = vpack.c.b16 %v1220, %v1218
    %v1257 = vpack.c.b16 %v1221, %v1219
    %v1258 = vpack.c.b16 %v1224, %v1222
    %v1259 = vpack.c.b16 %v1225, %v1223
    %v1260 = vpack.c.b16 %v1228, %v1226
    %v1261 = vpack.c.b16 %v1229, %v1227
    %1294 = vmatprep.subr.bf16.mxu0 %v1231
    %1295 = vmatpush1.bf16.msra.mxu0 %v1230
    %1296 = vmatprep.subr.bf16.mxu0 %v1233
    %1297 = vmatpush1.bf16.msra.mxu0 %v1232
    %1298 = vmatprep.subr.bf16.mxu0 %v1235
    %1299 = vmatpush1.bf16.msra.mxu0 %v1234
    %1300 = vmatprep.subr.bf16.mxu0 %v1237
    %1301 = vmatpush1.bf16.msra.mxu0 %v1236
    %1302 = vmatprep.subr.bf16.mxu0 %v1239
    %1303 = vmatpush1.bf16.msra.mxu0 %v1238
    %1304 = vmatprep.subr.bf16.mxu0 %v1241
    %1305 = vmatpush1.bf16.msra.mxu0 %v1240
    %1306 = vmatprep.subr.bf16.mxu0 %v1243
    %1307 = vmatpush1.bf16.msra.mxu0 %v1242
    %1308 = vmatprep.subr.bf16.mxu0 %v1245
    %1309 = vmatpush1.bf16.msra.mxu0 %v1244
    %1310 = vmatprep.subr.bf16.mxu0 %v1247
    %1311 = vmatpush1.bf16.msra.mxu0 %v1246
    %1312 = vmatprep.subr.bf16.mxu0 %v1249
    %1313 = vmatpush1.bf16.msra.mxu0 %v1248
    %1314 = vmatprep.subr.bf16.mxu0 %v1251
    %1315 = vmatpush1.bf16.msra.mxu0 %v1250
    %1316 = vmatprep.subr.bf16.mxu0 %v1253
    %1317 = vmatpush1.bf16.msra.mxu0 %v1252
    %1318 = vmatprep.subr.bf16.mxu0 %v1255
    %1319 = vmatpush1.bf16.msra.mxu0 %v1254
    %1320 = vmatprep.subr.bf16.mxu0 %v1257
    %1321 = vmatpush1.bf16.msra.mxu0 %v1256
    %1322 = vmatprep.subr.bf16.mxu0 %v1259
    %1323 = vmatpush1.bf16.msra.mxu0 %v1258
    %1324 = vmatprep.subr.bf16.mxu0 %v1261
    %1325 = vmatpush1.bf16.msra.mxu0 %v1260
    %1326 = vmatprep.mubr.bf16.mxu0 %v1089
    %1327 = vmatmul.mubr.bf16.gmra.mrb[0].mxu0 %v1088
    %v1328 = vpop.f32.mrb[0].mxu0
    %v1329 = vadd.f32 %v1127, %v1328
    %v1330 = vpop.f32.mrb[0].mxu0
    %v1331 = vadd.f32 %v1131, %v1330
    %v1332 = vpop.f32.mrb[0].mxu0
    %v1333 = vpop.f32.mrb[0].mxu0
    %1334 = vdwg.mxu0
    %v1335 = vtanh.pop %v1329
    %v1336 = vtanh.pop %v1331
    %v1337 = vpack.c.bf16 %v1335, %v1335
    %v1338 = vpack.c.bf16 %v1336, %v1336
    %v1339 = vld [vmem:[#allocation18] sm:$0xf]
    %v1340 = vld [vmem:[#allocation18 + $0x4] sm:$0xf]
    %v1341 = vld [vmem:[#allocation18 + $0x8] sm:$0xf]
    %v1342 = vld [vmem:[#allocation18 + $0xc] sm:$0xf]
    %v1343 = vld [vmem:[#allocation18 + $0x10] sm:$0xf]
    %v1344 = vld [vmem:[#allocation18 + $0x14] sm:$0xf]
    %v1345 = vld [vmem:[#allocation18 + $0x18] sm:$0xf]
    %v1346 = vld [vmem:[#allocation18 + $0x1c] sm:$0xf]
    %v1347 = vld [vmem:[#allocation18 + $0x20] sm:$0xf]
    %v1348 = vld [vmem:[#allocation18 + $0x24] sm:$0xf]
    %v1349 = vld [vmem:[#allocation18 + $0x28] sm:$0xf]
    %v1350 = vld [vmem:[#allocation18 + $0x2c] sm:$0xf]
    %v1351 = vld [vmem:[#allocation18 + $0x30] sm:$0xf]
    %v1352 = vld [vmem:[#allocation18 + $0x34] sm:$0xf]
    %v1353 = vld [vmem:[#allocation18 + $0x38] sm:$0xf]
    %v1354 = vld [vmem:[#allocation18 + $0x3c] sm:$0xf]
    %v1355 = vld [vmem:[#allocation18 + $0x40] sm:$0xf]
    %v1356 = vld [vmem:[#allocation18 + $0x44] sm:$0xf]
    %v1357 = vld [vmem:[#allocation18 + $0x48] sm:$0xf]
    %v1358 = vld [vmem:[#allocation18 + $0x4c] sm:$0xf]
    %v1359 = vld [vmem:[#allocation18 + $0x50] sm:$0xf]
    %v1360 = vld [vmem:[#allocation18 + $0x54] sm:$0xf]
    %v1361 = vld [vmem:[#allocation18 + $0x58] sm:$0xf]
    %v1362 = vld [vmem:[#allocation18 + $0x5c] sm:$0xf]
    %v1363 = vld [vmem:[#allocation18 + $0x60] sm:$0xf]
    %v1364 = vld [vmem:[#allocation18 + $0x64] sm:$0xf]
    %v1365 = vld [vmem:[#allocation18 + $0x68] sm:$0xf]
    %v1366 = vld [vmem:[#allocation18 + $0x6c] sm:$0xf]
    %v1367 = vld [vmem:[#allocation18 + $0x70] sm:$0xf]
    %v1368 = vld [vmem:[#allocation18 + $0x74] sm:$0xf]
    %v1369 = vld [vmem:[#allocation18 + $0x78] sm:$0xf]
    %v1370 = vld [vmem:[#allocation18 + $0x7c] sm:$0xf]
    %v1371 = vld [vmem:[#allocation20] sm:$0x1]
    %v1373 = vlaneseq
    %v1374 = vshrl.u32 %v1373, 7
    %v1375 = vsub.s32 0, %v1374
    %v1376 = vrot.slane %v1371, %v1375
    %v1410 = vunpack.c.l.b16 %v1339
    %v1411 = vunpack.c.l.b16 %v1340
    %v1412 = vunpack.c.l.b16 %v1341
    %v1413 = vunpack.c.l.b16 %v1342
    %v1414 = vunpack.c.l.b16 %v1343
    %v1415 = vunpack.c.l.b16 %v1344
    %v1416 = vunpack.c.l.b16 %v1345
    %v1417 = vunpack.c.l.b16 %v1346
    %v1418 = vunpack.c.l.b16 %v1347
    %v1419 = vunpack.c.l.b16 %v1348
    %v1420 = vunpack.c.l.b16 %v1349
    %v1421 = vunpack.c.l.b16 %v1350
    %v1422 = vunpack.c.l.b16 %v1351
    %v1423 = vunpack.c.l.b16 %v1352
    %v1424 = vunpack.c.l.b16 %v1353
    %v1425 = vunpack.c.l.b16 %v1354
    %v1426 = vunpack.c.l.b16 %v1355
    %v1427 = vunpack.c.l.b16 %v1356
    %v1428 = vunpack.c.l.b16 %v1357
    %v1429 = vunpack.c.l.b16 %v1358
    %v1430 = vunpack.c.l.b16 %v1359
    %v1431 = vunpack.c.l.b16 %v1360
    %v1432 = vunpack.c.l.b16 %v1361
    %v1433 = vunpack.c.l.b16 %v1362
    %v1434 = vunpack.c.l.b16 %v1363
    %v1435 = vunpack.c.l.b16 %v1364
    %v1436 = vunpack.c.l.b16 %v1365
    %v1437 = vunpack.c.l.b16 %v1366
    %v1438 = vunpack.c.l.b16 %v1367
    %v1439 = vunpack.c.l.b16 %v1368
    %v1440 = vunpack.c.l.b16 %v1369
    %v1441 = vunpack.c.l.b16 %v1370
    %v1442 = vpack.c.b16 %v1411, %v1410
    %v1443 = vpack.c.b16 %v1413, %v1412
    %v1444 = vpack.c.b16 %v1415, %v1414
    %v1445 = vpack.c.b16 %v1417, %v1416
    %v1446 = vpack.c.b16 %v1419, %v1418
    %v1447 = vpack.c.b16 %v1421, %v1420
    %v1448 = vpack.c.b16 %v1423, %v1422
    %v1449 = vpack.c.b16 %v1425, %v1424
    %v1450 = vpack.c.b16 %v1427, %v1426
    %v1451 = vpack.c.b16 %v1429, %v1428
    %v1452 = vpack.c.b16 %v1431, %v1430
    %v1453 = vpack.c.b16 %v1433, %v1432
    %v1454 = vpack.c.b16 %v1435, %v1434
    %v1455 = vpack.c.b16 %v1437, %v1436
    %v1456 = vpack.c.b16 %v1439, %v1438
    %v1457 = vpack.c.b16 %v1441, %v1440
    %1474 = vmatprep.subr.bf16.mxu0 0
    %1475 = vmatpush1.bf16.msra.mxu0 %v1442
    %1476 = vmatprep.subr.bf16.mxu0 0
    %1477 = vmatpush1.bf16.msra.mxu0 %v1443
    %1478 = vmatprep.subr.bf16.mxu0 0
    %1479 = vmatpush1.bf16.msra.mxu0 %v1444
    %1480 = vmatprep.subr.bf16.mxu0 0
    %1481 = vmatpush1.bf16.msra.mxu0 %v1445
    %1482 = vmatprep.subr.bf16.mxu0 0
    %1483 = vmatpush1.bf16.msra.mxu0 %v1446
    %1484 = vmatprep.subr.bf16.mxu0 0
    %1485 = vmatpush1.bf16.msra.mxu0 %v1447
    %1486 = vmatprep.subr.bf16.mxu0 0
    %1487 = vmatpush1.bf16.msra.mxu0 %v1448
    %1488 = vmatprep.subr.bf16.mxu0 0
    %1489 = vmatpush1.bf16.msra.mxu0 %v1449
    %1490 = vmatprep.subr.bf16.mxu0 0
    %1491 = vmatpush1.bf16.msra.mxu0 %v1450
    %1492 = vmatprep.subr.bf16.mxu0 0
    %1493 = vmatpush1.bf16.msra.mxu0 %v1451
    %1494 = vmatprep.subr.bf16.mxu0 0
    %1495 = vmatpush1.bf16.msra.mxu0 %v1452
    %1496 = vmatprep.subr.bf16.mxu0 0
    %1497 = vmatpush1.bf16.msra.mxu0 %v1453
    %1498 = vmatprep.subr.bf16.mxu0 0
    %1499 = vmatpush1.bf16.msra.mxu0 %v1454
    %1500 = vmatprep.subr.bf16.mxu0 0
    %1501 = vmatpush1.bf16.msra.mxu0 %v1455
    %1502 = vmatprep.subr.bf16.mxu0 0
    %1503 = vmatpush1.bf16.msra.mxu0 %v1456
    %1504 = vmatprep.subr.bf16.mxu0 0
    %1505 = vmatpush1.bf16.msra.mxu0 %v1457
    %1506 = vmatprep.mubr.bf16.mxu0 %v1338
    %1507 = vmatmul.mubr.bf16.gmra.mrb[0].mxu0 %v1337
    %v1508 = vpop.f32.mrb[0].mxu0
    %v1509 = vadd.f32 %v1376, %v1508
    %v1510 = vpop.f32.mrb[0].mxu0
    %v1511 = vpop.f32.mrb[0].mxu0
    %v1512 = vpop.f32.mrb[0].mxu0
    %1513 = vdwg.mxu0
    %v1514 = vtanh.pop %v1509
    %v1515 = vld [vmem:[#allocation21] sm:$0x1]
    %v1517 = vlaneseq
    %v1518 = vshrl.u32 %v1517, 7
    %v1519 = vsub.s32 0, %v1518
    %v1520 = vrot.slane %v1515, %v1519
    %v1522 = vmul.f32 %v1514, %v1520
    %vm1523 = vcmask 523264
    %v1524 = vsel %vm1523, %v1522, 0.0
    %1525 = vadd.xlane.f32.xlu0 %v1524
    %v1526 = vpop.xlane.xlu0 %1525
    %v1527 = vld [vmem:[#allocation2] sm:$0x1]
    %v1529 = vlaneseq
    %v1530 = vshrl.u32 %v1529, 7
    %v1531 = vsub.s32 0, %v1530
    %v1532 = vrot.slane %v1527, %v1531
    %v1534 = vadd.f32 %v1526, %v1532
    %vm1535 = vcmask 7168
    %1536 = vst.msk [vmem:[#allocation23] sm:$0xff] %vm1535, %v1534
    // Predicated region
    $region102: #{tpu_custom_call.1} parent=1 // pred_check
      _
    $region103: #{tpu_custom_call.1} parent=1 // pred_check_branch
      %1538 = sbr.rel (0) target = $region105
    $region104: #{tpu_custom_call.1} parent=1 // pred_region
      %s1540 = ssub.s32 128, 128
      %1541 = vsyncadd [#allocation5], %s1540
      %s1543 = sshll.u32 [#allocation23], 4
      %s1544 = int_to_ptr.vmem [resolvable:$true] %s1543
      %1546 = dma.vmem_to_hbm [thread:$0]  %s1544, 128, %s13, [#allocation5]
    $region105: #{tpu_custom_call.1} parent=1 // pred_fallthru
      _
    // Predicated region
    $region106: #{tpu_custom_call.1} parent=1 // pred_check
      _
    $region107: #{tpu_custom_call.1} parent=1 // pred_check_branch
      %1548 = sbr.rel (0) target = $region109
    $region108: #{tpu_custom_call.1} parent=1 // pred_region
      %1549 = dma.done [#allocation5], 128
    $region109: #{tpu_custom_call.1} parent=1 // pred_fallthru
      _
    %1550 = vsyncpa [#allocation4], 1
    %1551 = vsyncpa [#allocation7], 1
    %1552 = vsyncpa [#allocation10], 1
    %1553 = vsyncpa [#allocation13], 1
    %1554 = vsyncpa [#allocation16], 1
    %1555 = vsyncpa [#allocation19], 1
    %1556 = vsyncpa [#allocation22], 1
    %1557 = vsyncpa [#allocation5], 1

</llo_original>
